<compile_context>
chip_gen: v7x
topology: tpu7x:2x2x1
jax: 0.10.0
libtpu: 0.0.40
codegen_flags: <defaults>
</compile_context>

<pallas_src>
import jax
import jax.numpy as jnp
from jax.experimental import pallas as pl
from jax.experimental.pallas import tpu as pltpu


def deepnn_kernel(x_ref, *refs):
    """refs = (w1, b1, w2, b2, w3, b3, w4, b4, w5, b5, o_ref).

    Weights are (in, out) with eval-mode BN folded in; the last pair is zero-padded to a
    lane-dense width (128).  Matmul operands may be bf16; accumulation and the
    bias+ReLU epilogue are always f32.
    """
    o_ref = refs[-1]
    wb = refs[:-1]
    n_layers = len(wb) // 2
    op_dtype = wb[0].dtype                            # matmul operand dtype (f32 or bf16)

    h = x_ref[...]                                    # (TB, D_in), already op_dtype
    for li in range(n_layers):
        w_ref, b_ref = wb[2 * li], wb[2 * li + 1]
        h = jnp.dot(h.astype(op_dtype), w_ref[...],
                    preferred_element_type=jnp.float32) + b_ref[...]   # f32 epilogue
        if li < n_layers - 1:                         # ReLU on the 4 BN'd layers only
            h = jnp.maximum(h, 0.0)
    o_ref[...] = h.astype(o_ref.dtype)                # (TB, 128) lane-dense store


def fold_bn(w_t, b, gamma, beta, mean, var, eps=1e-5):
    """Fold eval-mode BatchNorm1d into the preceding Linear.

    w_t: (in, out) pre-transposed weight; b/gamma/beta/mean/var: (out,).
    Returns folded (in, out) weight and (1, out) bias, both f32.
    """
    scale = gamma / jnp.sqrt(var + eps)
    w_f = w_t * scale[None, :]
    b_f = (b - mean) * scale + beta
    return w_f, b_f.reshape(1, -1)


def _default_matmul_dtype():
    """bf16 MXU operands on v6e / v7x; f32 on v5e and older."""
    try:
        kind = jax.devices()[0].device_kind.lower()
    except Exception:
        return jnp.float32
    if ("v6" in kind) or ("v7" in kind) or ("7x" in kind):
        return jnp.bfloat16
    return jnp.float32


def deepnn_forward(x, params, *, tb=None, matmul_dtype=None, out_pad=128):
    """params: list of 5 (W_folded(in,out) f32, b_folded(1,out) f32) pairs."""
    B, d_in = x.shape
    if matmul_dtype is None:
        matmul_dtype = _default_matmul_dtype()

    # Fewer, bigger grid steps: single step for B <= 1024, else 512-row tiles
    # (multiple of 8; on v7x prefer B such that the step count is even so both
    # TensorCores get work — at small B one step on one TC is faster anyway).
    if tb is None:
        tb = B if B <= 1024 else 512
    tb = min(tb, B)

    # Lane-dense output: pad the final layer to out_pad (=128) columns; slice later.
    w5, b5 = params[-1]
    out_dim = w5.shape[1]
    pad = out_pad - out_dim
    w5p = jnp.pad(w5, ((0, 0), (0, pad)))
    b5p = jnp.pad(b5, ((0, 0), (0, pad)))
    layers = list(params[:-1]) + [(w5p, b5p)]

    x_op = x.astype(matmul_dtype)
    flat = []
    for w, b in layers:
        flat += [w.astype(matmul_dtype), b.astype(jnp.float32)]   # biases stay f32

    flops = 2 * B * sum(int(w.shape[0]) * int(w.shape[1]) for w, _ in layers)
    bytes_accessed = int(x_op.size) * x_op.dtype.itemsize \
        + sum(int(a.size) * a.dtype.itemsize for a in flat) \
        + B * out_pad * 4

    def _const_spec(shape, single_buffer):
        # Constant index_map -> block is VMEM-resident; single-buffer it when supported.
        if single_buffer:
            return pl.BlockSpec(shape, lambda i: (0, 0), pipeline_mode=pl.Buffered(1))
        return pl.BlockSpec(shape, lambda i: (0, 0))

    def _build(single_buffer_weights):
        in_specs = [pl.BlockSpec((tb, d_in), lambda i: (i, 0))]   # x: pipelined over batch
        for w, b in layers:
            in_specs.append(_const_spec(w.shape, single_buffer_weights))
            in_specs.append(_const_spec(b.shape, single_buffer_weights))
        return pl.pallas_call(
            deepnn_kernel,
            out_shape=jax.ShapeDtypeStruct((B, out_pad), jnp.float32),
            grid=(pl.cdiv(B, tb),),
            in_specs=in_specs,
            out_specs=pl.BlockSpec((tb, out_pad), lambda i: (i, 0)),
            compiler_params=pltpu.CompilerParams(
                dimension_semantics=("parallel",)),               # shard batch across TCs
            cost_estimate=pl.CostEstimate(
                flops=flops, transcendentals=0, bytes_accessed=bytes_accessed),
        )

    try:
        out_full = _build(True)(x_op, *flat)
    except Exception:
        # Fallback if single-buffered (Buffered(1)) constant blocks are not supported.
        out_full = _build(False)(x_op, *flat)

    return out_full[:, :out_dim]                                  # (B, 1)


if __name__ == "__main__":
    # Small shapes consistent with the module: batch=64, input_dim=32,
    # hidden = 256/128/64/32 (module defaults), output = 1.
    B, D_IN = 64, 32
    DIMS = [D_IN, 256, 128, 64, 32, 1]

    key = jax.random.PRNGKey(0)

    def uinit(k, shape, fan_in):
        bound = 1.0 / (fan_in ** 0.5)
        return jax.random.uniform(k, shape, jnp.float32, -bound, bound)

    keys = iter(jax.random.split(key, 64))
    x = jax.random.normal(next(keys), (B, D_IN), jnp.float32)

    raw = []   # (w_t(in,out), b, gamma, beta, mean, var); last layer has no BN
    for li in range(5):
        d_in, d_out = DIMS[li], DIMS[li + 1]
        w_t = uinit(next(keys), (d_in, d_out), d_in)              # (in, out) == torch W^T
        b = uinit(next(keys), (d_out,), d_in)
        if li < 4:
            gamma = 1.0 + 0.1 * jax.random.normal(next(keys), (d_out,), jnp.float32)
            beta = 0.1 * jax.random.normal(next(keys), (d_out,), jnp.float32)
            mean = 0.1 * jax.random.normal(next(keys), (d_out,), jnp.float32)
            var = jax.random.uniform(next(keys), (d_out,), jnp.float32, 0.5, 1.5)
            raw.append((w_t, b, gamma, beta, mean, var))
        else:
            raw.append((w_t, b, None, None, None, None))

    # Fold BN into Linear for the kernel (inference-mode running stats).
    params = []
    for li, (w_t, b, g, be, mu, var) in enumerate(raw):
        if li < 4:
            params.append(fold_bn(w_t, b, g, be, mu, var))
        else:
            params.append((w_t, b.reshape(1, -1)))

    # TODO(synk): dropout layers are inference-mode identity and are omitted
    # (stochastic training-time dropout is not implemented in this kernel).

    matmul_dtype = _default_matmul_dtype()
    out = jax.block_until_ready(deepnn_forward(x, params, matmul_dtype=matmul_dtype))

    # Pure-JAX f32 reference of the torch eval-mode forward (unfolded BN).
    eps = 1e-5
    h = x
    for li, (w_t, b, g, be, mu, var) in enumerate(raw):
        h = h @ w_t + b
        if li < 4:
            h = (h - mu) / jnp.sqrt(var + eps) * g + be
            h = jnp.maximum(h, 0.0)
    ref = h

    # f32 path is exact to ~1e-4; bf16 MXU operands (v6e/v7x) need a looser bound.
    tol = 1e-4 if matmul_dtype == jnp.float32 else 7.5e-2
    assert out.shape == (B, 1) and out.dtype == jnp.float32
    assert jnp.allclose(out, ref, atol=tol, rtol=tol), "mismatch vs reference"
    print("KERNEL_OK")
</pallas_src>

<mosaic_0001>
module attributes {stable_mosaic.version = 11 : i64} {
  func.func @deepnn_kernel(%arg0: i32, %arg1: memref<64x32xf32, #tpu.memory_space<vmem>>, %arg2: memref<32x256xf32, #tpu.memory_space<vmem>>, %arg3: memref<1x256xf32, #tpu.memory_space<vmem>>, %arg4: memref<256x128xf32, #tpu.memory_space<vmem>>, %arg5: memref<1x128xf32, #tpu.memory_space<vmem>>, %arg6: memref<128x64xf32, #tpu.memory_space<vmem>>, %arg7: memref<1x64xf32, #tpu.memory_space<vmem>>, %arg8: memref<64x32xf32, #tpu.memory_space<vmem>>, %arg9: memref<1x32xf32, #tpu.memory_space<vmem>>, %arg10: memref<32x128xf32, #tpu.memory_space<vmem>>, %arg11: memref<1x128xf32, #tpu.memory_space<vmem>>, %arg12: memref<64x128xf32, #tpu.memory_space<vmem>>) attributes {dimension_semantics = [#tpu.dimension_semantics<parallel>], iteration_bounds = array<i64: 1>, scalar_prefetch = 0 : i64, scratch_operands = 0 : i64, tpu.core_type = #tpu.core_type<tc>, window_params = [{transform_indices = @transform_0, window_bounds = array<i64: 64, 32>}, {pipeline_mode = #tpu.pipeline_mode<synchronous>, transform_indices = @transform_1, window_bounds = array<i64: 32, 256>}, {pipeline_mode = #tpu.pipeline_mode<synchronous>, transform_indices = @transform_2, window_bounds = array<i64: 1, 256>}, {pipeline_mode = #tpu.pipeline_mode<synchronous>, transform_indices = @transform_3, window_bounds = array<i64: 256, 128>}, {pipeline_mode = #tpu.pipeline_mode<synchronous>, transform_indices = @transform_4, window_bounds = array<i64: 1, 128>}, {pipeline_mode = #tpu.pipeline_mode<synchronous>, transform_indices = @transform_5, window_bounds = array<i64: 128, 64>}, {pipeline_mode = #tpu.pipeline_mode<synchronous>, transform_indices = @transform_6, window_bounds = array<i64: 1, 64>}, {pipeline_mode = #tpu.pipeline_mode<synchronous>, transform_indices = @transform_7, window_bounds = array<i64: 64, 32>}, {pipeline_mode = #tpu.pipeline_mode<synchronous>, transform_indices = @transform_8, window_bounds = array<i64: 1, 32>}, {pipeline_mode = #tpu.pipeline_mode<synchronous>, transform_indices = @transform_9, window_bounds = array<i64: 32, 128>}, {pipeline_mode = #tpu.pipeline_mode<synchronous>, transform_indices = @transform_10, window_bounds = array<i64: 1, 128>}, {transform_indices = @transform_11, window_bounds = array<i64: 64, 128>}]} {
    %c0 = arith.constant 0 : index
    %c0_0 = arith.constant 0 : index
    %0 = vector.load %arg1[%c0, %c0_0] : memref<64x32xf32, #tpu.memory_space<vmem>>, vector<64x32xf32>
    %c0_1 = arith.constant 0 : index
    %c0_2 = arith.constant 0 : index
    %1 = vector.load %arg2[%c0_1, %c0_2] : memref<32x256xf32, #tpu.memory_space<vmem>>, vector<32x256xf32>
    %cst = arith.constant dense<0.000000e+00> : vector<64x256xf32>
    %2 = tpu.matmul %0, %1, %cst {dimension_numbers = #tpu.dot_dimension_numbers<[1], [0], [0], [1], [0, 0, 1, 1], [], []>} : vector<64x32xf32>, vector<32x256xf32>, vector<64x256xf32> -> vector<64x256xf32>
    %c0_3 = arith.constant 0 : index
    %c0_4 = arith.constant 0 : index
    %3 = vector.load %arg3[%c0_3, %c0_4] : memref<1x256xf32, #tpu.memory_space<vmem>>, vector<1x256xf32>
    %4 = vector.broadcast %3 : vector<1x256xf32> to vector<64x256xf32>
    %5 = arith.addf %2, %4 : vector<64x256xf32>
    %cst_5 = arith.constant 0.000000e+00 : f32
    %6 = vector.broadcast %cst_5 : f32 to vector<64x256xf32>
    %7 = arith.maximumf %5, %6 : vector<64x256xf32>
    %c0_6 = arith.constant 0 : index
    %c0_7 = arith.constant 0 : index
    %8 = vector.load %arg4[%c0_6, %c0_7] : memref<256x128xf32, #tpu.memory_space<vmem>>, vector<256x128xf32>
    %cst_8 = arith.constant dense<0.000000e+00> : vector<64x128xf32>
    %9 = tpu.matmul %7, %8, %cst_8 {dimension_numbers = #tpu.dot_dimension_numbers<[1], [0], [0], [1], [0, 0, 1, 1], [], []>} : vector<64x256xf32>, vector<256x128xf32>, vector<64x128xf32> -> vector<64x128xf32>
    %c0_9 = arith.constant 0 : index
    %c0_10 = arith.constant 0 : index
    %10 = vector.load %arg5[%c0_9, %c0_10] : memref<1x128xf32, #tpu.memory_space<vmem>>, vector<1x128xf32>
    %11 = vector.broadcast %10 : vector<1x128xf32> to vector<64x128xf32>
    %12 = arith.addf %9, %11 : vector<64x128xf32>
    %cst_11 = arith.constant 0.000000e+00 : f32
    %13 = vector.broadcast %cst_11 : f32 to vector<64x128xf32>
    %14 = arith.maximumf %12, %13 : vector<64x128xf32>
    %c0_12 = arith.constant 0 : index
    %c0_13 = arith.constant 0 : index
    %15 = vector.load %arg6[%c0_12, %c0_13] : memref<128x64xf32, #tpu.memory_space<vmem>>, vector<128x64xf32>
    %cst_14 = arith.constant dense<0.000000e+00> : vector<64x64xf32>
    %16 = tpu.matmul %14, %15, %cst_14 {dimension_numbers = #tpu.dot_dimension_numbers<[1], [0], [0], [1], [0, 0, 1, 1], [], []>} : vector<64x128xf32>, vector<128x64xf32>, vector<64x64xf32> -> vector<64x64xf32>
    %c0_15 = arith.constant 0 : index
    %c0_16 = arith.constant 0 : index
    %17 = vector.load %arg7[%c0_15, %c0_16] : memref<1x64xf32, #tpu.memory_space<vmem>>, vector<1x64xf32>
    %18 = vector.broadcast %17 : vector<1x64xf32> to vector<64x64xf32>
    %19 = arith.addf %16, %18 : vector<64x64xf32>
    %cst_17 = arith.constant 0.000000e+00 : f32
    %20 = vector.broadcast %cst_17 : f32 to vector<64x64xf32>
    %21 = arith.maximumf %19, %20 : vector<64x64xf32>
    %c0_18 = arith.constant 0 : index
    %c0_19 = arith.constant 0 : index
    %22 = vector.load %arg8[%c0_18, %c0_19] : memref<64x32xf32, #tpu.memory_space<vmem>>, vector<64x32xf32>
    %cst_20 = arith.constant dense<0.000000e+00> : vector<64x32xf32>
    %23 = tpu.matmul %21, %22, %cst_20 {dimension_numbers = #tpu.dot_dimension_numbers<[1], [0], [0], [1], [0, 0, 1, 1], [], []>} : vector<64x64xf32>, vector<64x32xf32>, vector<64x32xf32> -> vector<64x32xf32>
    %c0_21 = arith.constant 0 : index
    %c0_22 = arith.constant 0 : index
    %24 = vector.load %arg9[%c0_21, %c0_22] : memref<1x32xf32, #tpu.memory_space<vmem>>, vector<1x32xf32>
    %25 = vector.broadcast %24 : vector<1x32xf32> to vector<64x32xf32>
    %26 = arith.addf %23, %25 : vector<64x32xf32>
    %cst_23 = arith.constant 0.000000e+00 : f32
    %27 = vector.broadcast %cst_23 : f32 to vector<64x32xf32>
    %28 = arith.maximumf %26, %27 : vector<64x32xf32>
    %c0_24 = arith.constant 0 : index
    %c0_25 = arith.constant 0 : index
    %29 = vector.load %arg10[%c0_24, %c0_25] : memref<32x128xf32, #tpu.memory_space<vmem>>, vector<32x128xf32>
    %cst_26 = arith.constant dense<0.000000e+00> : vector<64x128xf32>
    %30 = tpu.matmul %28, %29, %cst_26 {dimension_numbers = #tpu.dot_dimension_numbers<[1], [0], [0], [1], [0, 0, 1, 1], [], []>} : vector<64x32xf32>, vector<32x128xf32>, vector<64x128xf32> -> vector<64x128xf32>
    %c0_27 = arith.constant 0 : index
    %c0_28 = arith.constant 0 : index
    %31 = vector.load %arg11[%c0_27, %c0_28] : memref<1x128xf32, #tpu.memory_space<vmem>>, vector<1x128xf32>
    %32 = vector.broadcast %31 : vector<1x128xf32> to vector<64x128xf32>
    %33 = arith.addf %30, %32 : vector<64x128xf32>
    %c0_29 = arith.constant 0 : index
    %c0_30 = arith.constant 0 : index
    %34 = vector.load %arg12[%c0_29, %c0_30] : memref<64x128xf32, #tpu.memory_space<vmem>>, vector<64x128xf32>
    tpu.vector_store %arg12[%c0_29, %c0_30], %33 {strides = array<i32>} : memref<64x128xf32, #tpu.memory_space<vmem>>, vector<64x128xf32>,
    return
  }
  func.func @transform_0(%arg0: i32) -> (i32, i32) {
    %c0_i32 = arith.constant 0 : i32
    %c0_i32_0 = arith.constant 0 : i32
    return %arg0, %c0_i32 : i32, i32
  }
  func.func @transform_1(%arg0: i32) -> (i32, i32) {
    %c0_i32 = arith.constant 0 : i32
    %c0_i32_0 = arith.constant 0 : i32
    %c0_i32_1 = arith.constant 0 : i32
    return %c0_i32, %c0_i32_0 : i32, i32
  }
  func.func @transform_2(%arg0: i32) -> (i32, i32) {
    %c0_i32 = arith.constant 0 : i32
    %c0_i32_0 = arith.constant 0 : i32
    %c0_i32_1 = arith.constant 0 : i32
    return %c0_i32, %c0_i32_0 : i32, i32
  }
  func.func @transform_3(%arg0: i32) -> (i32, i32) {
    %c0_i32 = arith.constant 0 : i32
    %c0_i32_0 = arith.constant 0 : i32
    %c0_i32_1 = arith.constant 0 : i32
    return %c0_i32, %c0_i32_0 : i32, i32
  }
  func.func @transform_4(%arg0: i32) -> (i32, i32) {
    %c0_i32 = arith.constant 0 : i32
    %c0_i32_0 = arith.constant 0 : i32
    %c0_i32_1 = arith.constant 0 : i32
    return %c0_i32, %c0_i32_0 : i32, i32
  }
  func.func @transform_5(%arg0: i32) -> (i32, i32) {
    %c0_i32 = arith.constant 0 : i32
    %c0_i32_0 = arith.constant 0 : i32
    %c0_i32_1 = arith.constant 0 : i32
    return %c0_i32, %c0_i32_0 : i32, i32
  }
  func.func @transform_6(%arg0: i32) -> (i32, i32) {
    %c0_i32 = arith.constant 0 : i32
    %c0_i32_0 = arith.constant 0 : i32
    %c0_i32_1 = arith.constant 0 : i32
    return %c0_i32, %c0_i32_0 : i32, i32
  }
  func.func @transform_7(%arg0: i32) -> (i32, i32) {
    %c0_i32 = arith.constant 0 : i32
    %c0_i32_0 = arith.constant 0 : i32
    %c0_i32_1 = arith.constant 0 : i32
    return %c0_i32, %c0_i32_0 : i32, i32
  }
  func.func @transform_8(%arg0: i32) -> (i32, i32) {
    %c0_i32 = arith.constant 0 : i32
    %c0_i32_0 = arith.constant 0 : i32
    %c0_i32_1 = arith.constant 0 : i32
    return %c0_i32, %c0_i32_0 : i32, i32
  }
  func.func @transform_9(%arg0: i32) -> (i32, i32) {
    %c0_i32 = arith.constant 0 : i32
    %c0_i32_0 = arith.constant 0 : i32
    %c0_i32_1 = arith.constant 0 : i32
    return %c0_i32, %c0_i32_0 : i32, i32
  }
  func.func @transform_10(%arg0: i32) -> (i32, i32) {
    %c0_i32 = arith.constant 0 : i32
    %c0_i32_0 = arith.constant 0 : i32
    %c0_i32_1 = arith.constant 0 : i32
    return %c0_i32, %c0_i32_0 : i32, i32
  }
  func.func @transform_11(%arg0: i32) -> (i32, i32) {
    %c0_i32 = arith.constant 0 : i32
    %c0_i32_0 = arith.constant 0 : i32
    return %arg0, %c0_i32 : i32, i32
  }
}

module attributes {stable_mosaic.version = 11 : i64} {
  func.func @deepnn_kernel(%arg0: i32, %arg1: memref<64x32xf32, #tpu.memory_space<vmem>>, %arg2: memref<32x256xf32, #tpu.memory_space<vmem>>, %arg3: memref<1x256xf32, #tpu.memory_space<vmem>>, %arg4: memref<256x128xf32, #tpu.memory_space<vmem>>, %arg5: memref<1x128xf32, #tpu.memory_space<vmem>>, %arg6: memref<128x64xf32, #tpu.memory_space<vmem>>, %arg7: memref<1x64xf32, #tpu.memory_space<vmem>>, %arg8: memref<64x32xf32, #tpu.memory_space<vmem>>, %arg9: memref<1x32xf32, #tpu.memory_space<vmem>>, %arg10: memref<32x128xf32, #tpu.memory_space<vmem>>, %arg11: memref<1x128xf32, #tpu.memory_space<vmem>>, %arg12: memref<64x128xf32, #tpu.memory_space<vmem>>) attributes {dimension_semantics = [#tpu.dimension_semantics<parallel>], iteration_bounds = array<i64: 1>, scalar_prefetch = 0 : i64, scratch_operands = 0 : i64, tpu.core_type = #tpu.core_type<tc>, window_params = [{transform_indices = @transform_0, window_bounds = array<i64: 64, 32>}, {pipeline_mode = #tpu.pipeline_mode<synchronous>, transform_indices = @transform_1, window_bounds = array<i64: 32, 256>}, {pipeline_mode = #tpu.pipeline_mode<synchronous>, transform_indices = @transform_2, window_bounds = array<i64: 1, 256>}, {pipeline_mode = #tpu.pipeline_mode<synchronous>, transform_indices = @transform_3, window_bounds = array<i64: 256, 128>}, {pipeline_mode = #tpu.pipeline_mode<synchronous>, transform_indices = @transform_4, window_bounds = array<i64: 1, 128>}, {pipeline_mode = #tpu.pipeline_mode<synchronous>, transform_indices = @transform_5, window_bounds = array<i64: 128, 64>}, {pipeline_mode = #tpu.pipeline_mode<synchronous>, transform_indices = @transform_6, window_bounds = array<i64: 1, 64>}, {pipeline_mode = #tpu.pipeline_mode<synchronous>, transform_indices = @transform_7, window_bounds = array<i64: 64, 32>}, {pipeline_mode = #tpu.pipeline_mode<synchronous>, transform_indices = @transform_8, window_bounds = array<i64: 1, 32>}, {pipeline_mode = #tpu.pipeline_mode<synchronous>, transform_indices = @transform_9, window_bounds = array<i64: 32, 128>}, {pipeline_mode = #tpu.pipeline_mode<synchronous>, transform_indices = @transform_10, window_bounds = array<i64: 1, 128>}, {transform_indices = @transform_11, window_bounds = array<i64: 64, 128>}]} {
    %c0 = arith.constant 0 : index
    %c0_0 = arith.constant 0 : index
    %0 = vector.load %arg1[%c0, %c0_0] : memref<64x32xf32, #tpu.memory_space<vmem>>, vector<64x32xf32>
    %c0_1 = arith.constant 0 : index
    %c0_2 = arith.constant 0 : index
    %1 = vector.load %arg2[%c0_1, %c0_2] : memref<32x256xf32, #tpu.memory_space<vmem>>, vector<32x256xf32>
    %cst = arith.constant dense<0.000000e+00> : vector<64x256xf32>
    %2 = tpu.matmul %0, %1, %cst {dimension_numbers = #tpu.dot_dimension_numbers<[1], [0], [0], [1], [0, 0, 1, 1], [], []>} : vector<64x32xf32>, vector<32x256xf32>, vector<64x256xf32> -> vector<64x256xf32>
    %c0_3 = arith.constant 0 : index
    %c0_4 = arith.constant 0 : index
    %3 = vector.load %arg3[%c0_3, %c0_4] : memref<1x256xf32, #tpu.memory_space<vmem>>, vector<1x256xf32>
    %4 = vector.broadcast %3 : vector<1x256xf32> to vector<64x256xf32>
    %5 = arith.addf %2, %4 : vector<64x256xf32>
    %cst_5 = arith.constant 0.000000e+00 : f32
    %6 = vector.broadcast %cst_5 : f32 to vector<64x256xf32>
    %7 = arith.maximumf %5, %6 : vector<64x256xf32>
    %c0_6 = arith.constant 0 : index
    %c0_7 = arith.constant 0 : index
    %8 = vector.load %arg4[%c0_6, %c0_7] : memref<256x128xf32, #tpu.memory_space<vmem>>, vector<256x128xf32>
    %cst_8 = arith.constant dense<0.000000e+00> : vector<64x128xf32>
    %9 = tpu.matmul %7, %8, %cst_8 {dimension_numbers = #tpu.dot_dimension_numbers<[1], [0], [0], [1], [0, 0, 1, 1], [], []>} : vector<64x256xf32>, vector<256x128xf32>, vector<64x128xf32> -> vector<64x128xf32>
    %c0_9 = arith.constant 0 : index
    %c0_10 = arith.constant 0 : index
    %10 = vector.load %arg5[%c0_9, %c0_10] : memref<1x128xf32, #tpu.memory_space<vmem>>, vector<1x128xf32>
    %11 = vector.broadcast %10 : vector<1x128xf32> to vector<64x128xf32>
    %12 = arith.addf %9, %11 : vector<64x128xf32>
    %cst_11 = arith.constant 0.000000e+00 : f32
    %13 = vector.broadcast %cst_11 : f32 to vector<64x128xf32>
    %14 = arith.maximumf %12, %13 : vector<64x128xf32>
    %c0_12 = arith.constant 0 : index
    %c0_13 = arith.constant 0 : index
    %15 = vector.load %arg6[%c0_12, %c0_13] : memref<128x64xf32, #tpu.memory_space<vmem>>, vector<128x64xf32>
    %cst_14 = arith.constant dense<0.000000e+00> : vector<64x64xf32>
    %16 = tpu.matmul %14, %15, %cst_14 {dimension_numbers = #tpu.dot_dimension_numbers<[1], [0], [0], [1], [0, 0, 1, 1], [], []>} : vector<64x128xf32>, vector<128x64xf32>, vector<64x64xf32> -> vector<64x64xf32>
    %c0_15 = arith.constant 0 : index
    %c0_16 = arith.constant 0 : index
    %17 = vector.load %arg7[%c0_15, %c0_16] : memref<1x64xf32, #tpu.memory_space<vmem>>, vector<1x64xf32>
    %18 = vector.broadcast %17 : vector<1x64xf32> to vector<64x64xf32>
    %19 = arith.addf %16, %18 : vector<64x64xf32>
    %cst_17 = arith.constant 0.000000e+00 : f32
    %20 = vector.broadcast %cst_17 : f32 to vector<64x64xf32>
    %21 = arith.maximumf %19, %20 : vector<64x64xf32>
    %c0_18 = arith.constant 0 : index
    %c0_19 = arith.constant 0 : index
    %22 = vector.load %arg8[%c0_18, %c0_19] : memref<64x32xf32, #tpu.memory_space<vmem>>, vector<64x32xf32>
    %cst_20 = arith.constant dense<0.000000e+00> : vector<64x32xf32>
    %23 = tpu.matmul %21, %22, %cst_20 {dimension_numbers = #tpu.dot_dimension_numbers<[1], [0], [0], [1], [0, 0, 1, 1], [], []>} : vector<64x64xf32>, vector<64x32xf32>, vector<64x32xf32> -> vector<64x32xf32>
    %c0_21 = arith.constant 0 : index
    %c0_22 = arith.constant 0 : index
    %24 = vector.load %arg9[%c0_21, %c0_22] : memref<1x32xf32, #tpu.memory_space<vmem>>, vector<1x32xf32>
    %25 = vector.broadcast %24 : vector<1x32xf32> to vector<64x32xf32>
    %26 = arith.addf %23, %25 : vector<64x32xf32>
    %cst_23 = arith.constant 0.000000e+00 : f32
    %27 = vector.broadcast %cst_23 : f32 to vector<64x32xf32>
    %28 = arith.maximumf %26, %27 : vector<64x32xf32>
    %c0_24 = arith.constant 0 : index
    %c0_25 = arith.constant 0 : index
    %29 = vector.load %arg10[%c0_24, %c0_25] : memref<32x128xf32, #tpu.memory_space<vmem>>, vector<32x128xf32>
    %cst_26 = arith.constant dense<0.000000e+00> : vector<64x128xf32>
    %30 = tpu.matmul %28, %29, %cst_26 {dimension_numbers = #tpu.dot_dimension_numbers<[1], [0], [0], [1], [0, 0, 1, 1], [], []>} : vector<64x32xf32>, vector<32x128xf32>, vector<64x128xf32> -> vector<64x128xf32>
    %c0_27 = arith.constant 0 : index
    %c0_28 = arith.constant 0 : index
    %31 = vector.load %arg11[%c0_27, %c0_28] : memref<1x128xf32, #tpu.memory_space<vmem>>, vector<1x128xf32>
    %32 = vector.broadcast %31 : vector<1x128xf32> to vector<64x128xf32>
    %33 = arith.addf %30, %32 : vector<64x128xf32>
    %c0_29 = arith.constant 0 : index
    %c0_30 = arith.constant 0 : index
    %34 = vector.load %arg12[%c0_29, %c0_30] : memref<64x128xf32, #tpu.memory_space<vmem>>, vector<64x128xf32>
    tpu.vector_store %arg12[%c0_29, %c0_30], %33 {strides = array<i32>} : memref<64x128xf32, #tpu.memory_space<vmem>>, vector<64x128xf32>,
    return
  }
  func.func @transform_0(%arg0: i32) -> (i32, i32) {
    %c0_i32 = arith.constant 0 : i32
    %c0_i32_0 = arith.constant 0 : i32
    return %arg0, %c0_i32 : i32, i32
  }
  func.func @transform_1(%arg0: i32) -> (i32, i32) {
    %c0_i32 = arith.constant 0 : i32
    %c0_i32_0 = arith.constant 0 : i32
    %c0_i32_1 = arith.constant 0 : i32
    return %c0_i32, %c0_i32_0 : i32, i32
  }
  func.func @transform_2(%arg0: i32) -> (i32, i32) {
    %c0_i32 = arith.constant 0 : i32
    %c0_i32_0 = arith.constant 0 : i32
    %c0_i32_1 = arith.constant 0 : i32
    return %c0_i32, %c0_i32_0 : i32, i32
  }
  func.func @transform_3(%arg0: i32) -> (i32, i32) {
    %c0_i32 = arith.constant 0 : i32
    %c0_i32_0 = arith.constant 0 : i32
    %c0_i32_1 = arith.constant 0 : i32
    return %c0_i32, %c0_i32_0 : i32, i32
  }
  func.func @transform_4(%arg0: i32) -> (i32, i32) {
    %c0_i32 = arith.constant 0 : i32
    %c0_i32_0 = arith.constant 0 : i32
    %c0_i32_1 = arith.constant 0 : i32
    return %c0_i32, %c0_i32_0 : i32, i32
  }
  func.func @transform_5(%arg0: i32) -> (i32, i32) {
    %c0_i32 = arith.constant 0 : i32
    %c0_i32_0 = arith.constant 0 : i32
    %c0_i32_1 = arith.constant 0 : i32
    return %c0_i32, %c0_i32_0 : i32, i32
  }
  func.func @transform_6(%arg0: i32) -> (i32, i32) {
    %c0_i32 = arith.constant 0 : i32
    %c0_i32_0 = arith.constant 0 : i32
    %c0_i32_1 = arith.constant 0 : i32
    return %c0_i32, %c0_i32_0 : i32, i32
  }
  func.func @transform_7(%arg0: i32) -> (i32, i32) {
    %c0_i32 = arith.constant 0 : i32
    %c0_i32_0 = arith.constant 0 : i32
    %c0_i32_1 = arith.constant 0 : i32
    return %c0_i32, %c0_i32_0 : i32, i32
  }
  func.func @transform_8(%arg0: i32) -> (i32, i32) {
    %c0_i32 = arith.constant 0 : i32
    %c0_i32_0 = arith.constant 0 : i32
    %c0_i32_1 = arith.constant 0 : i32
    return %c0_i32, %c0_i32_0 : i32, i32
  }
  func.func @transform_9(%arg0: i32) -> (i32, i32) {
    %c0_i32 = arith.constant 0 : i32
    %c0_i32_0 = arith.constant 0 : i32
    %c0_i32_1 = arith.constant 0 : i32
    return %c0_i32, %c0_i32_0 : i32, i32
  }
  func.func @transform_10(%arg0: i32) -> (i32, i32) {
    %c0_i32 = arith.constant 0 : i32
    %c0_i32_0 = arith.constant 0 : i32
    %c0_i32_1 = arith.constant 0 : i32
    return %c0_i32, %c0_i32_0 : i32, i32
  }
  func.func @transform_11(%arg0: i32) -> (i32, i32) {
    %c0_i32 = arith.constant 0 : i32
    %c0_i32_0 = arith.constant 0 : i32
    return %arg0, %c0_i32 : i32, i32
  }
}

</mosaic_0001>

<llo_original>
// kernel: tpu_custom_call.1
$region0: #{tpu_custom_call.1}
  #allocation0 [shape = 'u32[]', space=smem, size = 0x4, offset = 0x4, fixed_abs, tag = 'smem constant byte address 0x4 - core index']
  #allocation1 [shape = 'u32[144,128]{1,0:T(1,128)}', space=vmem, size = 0x12000, scoped, tag = 'internal scratch']
  %s0 = inlined_call_operand.vmem [shape: f32[64,32], index: 0, kind: input, shape index: {}]
  %s1 = inlined_call_operand.vmem [shape: f32[32,256], index: 1, kind: input, shape index: {}]
  %s2 = inlined_call_operand.vmem [shape: f32[1,256], index: 2, kind: input, shape index: {}]
  %s3 = inlined_call_operand.vmem [shape: f32[256,128], index: 3, kind: input, shape index: {}]
  %s4 = inlined_call_operand.vmem [shape: f32[1,128], index: 4, kind: input, shape index: {}]
  %s5 = inlined_call_operand.vmem [shape: f32[128,64], index: 5, kind: input, shape index: {}]
  %s6 = inlined_call_operand.vmem [shape: f32[1,64], index: 6, kind: input, shape index: {}]
  %s7 = inlined_call_operand.vmem [shape: f32[64,32], index: 7, kind: input, shape index: {}]
  %s8 = inlined_call_operand.vmem [shape: f32[1,32], index: 8, kind: input, shape index: {}]
  %s9 = inlined_call_operand.hbm [shape: f32[32,128], index: 9, kind: input, shape index: {}]
  %s10 = inlined_call_operand.vmem [shape: f32[1,128], index: 10, kind: input, shape index: {}]
  %s11 = inlined_call_operand.hbm [shape: f32[64,128], index: 11, kind: output, shape index: {}]
  %s12 = sld [smem:[#allocation0]]
  $region58: #{tpu_custom_call.1} parent=0
    _
  %s14 = ssub.s32 1, %s12
  %s15 = scalar_select 0, %s14, %s12
  $region1: #{tpu_custom_call.1} parent=0
    #allocation2 [shape = 'u8[16384]{0}', space=vmem, size = 0x4000, scoped, tag = 'input window, operand 9, single buffered']
    #allocation3 [shape = 's32[1]{0}', space=sflag, size = 0x4, scoped, tag = 'scoped memory for tpu_custom_call.1']
    #allocation4 [shape = 's32[1]{0}', space=sflag, size = 0x4, scoped, tag = 'scoped memory for tpu_custom_call.1']
    #allocation5 [shape = 'u8[32768]{0}', space=vmem, size = 0x8000, scoped, tag = 'output window, operand 0, single buffered']
    %16 = vsyncpa [#allocation3], 0
    %17 = vsyncpa [#allocation4], 0
    // Predicated region
    $region2: #{tpu_custom_call.1} parent=1 // pred_check
      _
    $region3: #{tpu_custom_call.1} parent=1 // pred_check_branch
      %19 = sbr.rel (0) target = $region5
    $region4: #{tpu_custom_call.1} parent=1 // pred_region
      _
    $region5: #{tpu_custom_call.1} parent=1 // pred_fallthru
      _
    // Predicated region
    $region6: #{tpu_custom_call.1} parent=1 // pred_check
      _
    $region7: #{tpu_custom_call.1} parent=1 // pred_check_branch
      %21 = sbr.rel (0) target = $region9
    $region8: #{tpu_custom_call.1} parent=1 // pred_region
      _
    $region9: #{tpu_custom_call.1} parent=1 // pred_fallthru
      _
    // Predicated region
    $region10: #{tpu_custom_call.1} parent=1 // pred_check
      _
    $region11: #{tpu_custom_call.1} parent=1 // pred_check_branch
      %23 = sbr.rel (0) target = $region13
    $region12: #{tpu_custom_call.1} parent=1 // pred_region
      _
    $region13: #{tpu_custom_call.1} parent=1 // pred_fallthru
      _
    // Predicated region
    $region14: #{tpu_custom_call.1} parent=1 // pred_check
      _
    $region15: #{tpu_custom_call.1} parent=1 // pred_check_branch
      %25 = sbr.rel (0) target = $region17
    $region16: #{tpu_custom_call.1} parent=1 // pred_region
      _
    $region17: #{tpu_custom_call.1} parent=1 // pred_fallthru
      _
    // Predicated region
    $region18: #{tpu_custom_call.1} parent=1 // pred_check
      _
    $region19: #{tpu_custom_call.1} parent=1 // pred_check_branch
      %27 = sbr.rel (0) target = $region21
    $region20: #{tpu_custom_call.1} parent=1 // pred_region
      _
    $region21: #{tpu_custom_call.1} parent=1 // pred_fallthru
      _
    // Predicated region
    $region22: #{tpu_custom_call.1} parent=1 // pred_check
      _
    $region23: #{tpu_custom_call.1} parent=1 // pred_check_branch
      %29 = sbr.rel (0) target = $region25
    $region24: #{tpu_custom_call.1} parent=1 // pred_region
      _
    $region25: #{tpu_custom_call.1} parent=1 // pred_fallthru
      _
    // Predicated region
    $region26: #{tpu_custom_call.1} parent=1 // pred_check
      _
    $region27: #{tpu_custom_call.1} parent=1 // pred_check_branch
      %31 = sbr.rel (0) target = $region29
    $region28: #{tpu_custom_call.1} parent=1 // pred_region
      _
    $region29: #{tpu_custom_call.1} parent=1 // pred_fallthru
      _
    // Predicated region
    $region30: #{tpu_custom_call.1} parent=1 // pred_check
      _
    $region31: #{tpu_custom_call.1} parent=1 // pred_check_branch
      %33 = sbr.rel (0) target = $region33
    $region32: #{tpu_custom_call.1} parent=1 // pred_region
      _
    $region33: #{tpu_custom_call.1} parent=1 // pred_fallthru
      _
    // Predicated region
    $region34: #{tpu_custom_call.1} parent=1 // pred_check
      _
    $region35: #{tpu_custom_call.1} parent=1 // pred_check_branch
      %35 = sbr.rel (0) target = $region37
    $region36: #{tpu_custom_call.1} parent=1 // pred_region
      _
    $region37: #{tpu_custom_call.1} parent=1 // pred_fallthru
      _
    // Predicated region
    $region38: #{tpu_custom_call.1} parent=1 // pred_check
      _
    $region39: #{tpu_custom_call.1} parent=1 // pred_check_branch
      %37 = sbr.rel (0) target = $region41
    $region40: #{tpu_custom_call.1} parent=1 // pred_region
      %s39 = ssub.s32 512, 512
      %40 = vsyncadd [#allocation3], %s39
      %s41 = sshll.u32 [#allocation2], 4
      %s42 = int_to_ptr.vmem [resolvable:$true] %s41
      %47 = dma.hbm_to_vmem [thread:$0]  %s9, 512, %s42, [#allocation3], 128, 128, 8
    $region41: #{tpu_custom_call.1} parent=1 // pred_fallthru
      _
    // Predicated region
    $region42: #{tpu_custom_call.1} parent=1 // pred_check
      _
    $region43: #{tpu_custom_call.1} parent=1 // pred_check_branch
      %49 = sbr.rel (0) target = $region45
    $region44: #{tpu_custom_call.1} parent=1 // pred_region
      _
    $region45: #{tpu_custom_call.1} parent=1 // pred_fallthru
      _
    // Predicated region
    $region46: #{tpu_custom_call.1} parent=1 // pred_check
      _
    $region47: #{tpu_custom_call.1} parent=1 // pred_check_branch
      %51 = sbr.rel (0) target = $region49
    $region48: #{tpu_custom_call.1} parent=1 // pred_region
      %52 = dma.done [#allocation3], 512
    $region49: #{tpu_custom_call.1} parent=1 // pred_fallthru
      _
    %v53 = vld [vmem:[%s0] sm:$0xff]
    %v54 = vld [vmem:[%s0 + $0x8] sm:$0xff]
    %v55 = vld [vmem:[%s0 + $0x10] sm:$0xff]
    %v56 = vld [vmem:[%s0 + $0x18] sm:$0xff]
    %v57 = vld [vmem:[%s0 + $0x20] sm:$0xff]
    %v58 = vld [vmem:[%s0 + $0x28] sm:$0xff]
    %v59 = vld [vmem:[%s0 + $0x30] sm:$0xff]
    %v60 = vld [vmem:[%s0 + $0x38] sm:$0xff]
    %v61 = vld [vmem:[%s1] sm:$0xff]
    %v62 = vld [vmem:[%s1 + $0x8] sm:$0xff]
    %v63 = vld [vmem:[%s1 + $0x10] sm:$0xff]
    %v64 = vld [vmem:[%s1 + $0x18] sm:$0xff]
    %v65 = vld [vmem:[%s1 + $0x20] sm:$0xff]
    %v66 = vld [vmem:[%s1 + $0x28] sm:$0xff]
    %v67 = vld [vmem:[%s1 + $0x30] sm:$0xff]
    %v68 = vld [vmem:[%s1 + $0x38] sm:$0xff]
    %v69 = vld [vmem:[%s2] sm:$0x3]
    %v71 = vlaneseq
    %v72 = vshrl.u32 %v71, 7
    %v73 = vsub.s32 0, %v72
    %v74 = vrot.slane %v69, %v73
    %v75 = vlaneseq
    %v76 = vshrl.u32 %v75, 7
    %v77 = vsub.s32 1, %v76
    %v78 = vrot.slane %v69, %v77
    %vm81 = vcmask 261120
    %v83 = vsel %vm81, %v53, 0
    %v86 = vsel %vm81, %v54, 0
    %v89 = vsel %vm81, %v55, 0
    %v92 = vsel %vm81, %v56, 0
    %v95 = vsel %vm81, %v57, 0
    %v98 = vsel %vm81, %v58, 0
    %v101 = vsel %vm81, %v59, 0
    %v104 = vsel %vm81, %v60, 0
    %106 = vmatprep.subr.mxu0 %v62
    %107 = vmatpush1.msra.mxu0 %v61
    %108 = vmatprep.subr.mxu0 %v64
    %109 = vmatpush1.msra.mxu0 %v63
    %110 = vmatprep.subr.mxu0 %v66
    %111 = vmatpush1.msra.mxu0 %v65
    %112 = vmatprep.subr.mxu0 %v68
    %113 = vmatpush1.msra.mxu0 %v67
    %114 = vmatprep.subr.mxu0 0.0
    %115 = vmatpush1.msra.mxu0 0.0
    %116 = vmatprep.subr.mxu0 0.0
    %117 = vmatpush1.msra.mxu0 0.0
    %118 = vmatprep.subr.mxu0 0.0
    %119 = vmatpush1.msra.mxu0 0.0
    %120 = vmatprep.subr.mxu0 0.0
    %121 = vmatpush1.msra.mxu0 0.0
    %122 = vmatprep.subr.mxu0 0.0
    %123 = vmatpush1.msra.mxu0 0.0
    %124 = vmatprep.subr.mxu0 0.0
    %125 = vmatpush1.msra.mxu0 0.0
    %126 = vmatprep.subr.mxu0 0.0
    %127 = vmatpush1.msra.mxu0 0.0
    %128 = vmatprep.subr.mxu0 0.0
    %129 = vmatpush1.msra.mxu0 0.0
    %130 = vmatprep.subr.mxu0 0.0
    %131 = vmatpush1.msra.mxu0 0.0
    %132 = vmatprep.subr.mxu0 0.0
    %133 = vmatpush1.msra.mxu0 0.0
    %134 = vmatprep.subr.mxu0 0.0
    %135 = vmatpush1.msra.mxu0 0.0
    %136 = vmatprep.subr.mxu0 0.0
    %137 = vmatpush1.msra.mxu0 0.0
    %138 = vmatprep.subr.mxu0 0.0
    %139 = vmatpush1.msra.mxu0 0.0
    %140 = vmatprep.subr.mxu0 0.0
    %141 = vmatpush1.msra.mxu0 0.0
    %142 = vmatprep.subr.mxu0 0.0
    %143 = vmatpush1.msra.mxu0 0.0
    %144 = vmatprep.subr.mxu0 0.0
    %145 = vmatpush1.msra.mxu0 0.0
    %146 = vmatprep.subr.mxu0 0.0
    %147 = vmatpush1.msra.mxu0 0.0
    %148 = vmatprep.subr.mxu0 0.0
    %149 = vmatpush1.msra.mxu0 0.0
    %150 = vmatprep.subr.mxu0 0.0
    %151 = vmatpush1.msra.mxu0 0.0
    %152 = vmatprep.subr.mxu0 0.0
    %153 = vmatpush1.msra.mxu0 0.0
    %154 = vmatprep.subr.mxu0 0.0
    %155 = vmatpush1.msra.mxu0 0.0
    %156 = vmatprep.subr.mxu0 0.0
    %157 = vmatpush1.msra.mxu0 0.0
    %158 = vmatprep.subr.mxu0 0.0
    %159 = vmatpush1.msra.mxu0 0.0
    %160 = vmatprep.subr.mxu0 0.0
    %161 = vmatpush1.msra.mxu0 0.0
    %162 = vmatprep.subr.mxu0 0.0
    %163 = vmatpush1.msra.mxu0 0.0
    %164 = vmatprep.subr.mxu0 0.0
    %165 = vmatpush1.msra.mxu0 0.0
    %166 = vmatprep.subr.mxu0 0.0
    %167 = vmatpush1.msra.mxu0 0.0
    %168 = vmatprep.subr.mxu0 0.0
    %169 = vmatpush1.msra.mxu0 0.0
    %170 = vmatprep.mubr.f32.mxu0 0.0
    %171 = vmatmul.mubr.f32.gmra.mrb[0].mxu0 %v83
    %v172 = vpop.f32.mrb[0].mxu0
    %v173 = vadd.f32 %v74, %v172
    %v174 = vpop.f32.mrb[0].mxu0
    %v175 = vadd.f32 %v78, %v174
    %176 = vmatprep.mubr.f32.mxu0 0.0
    %177 = vmatmul.mubr.f32.gmra.mrb[0].mxu0 %v86
    %v178 = vpop.f32.mrb[0].mxu0
    %v179 = vadd.f32 %v74, %v178
    %v180 = vpop.f32.mrb[0].mxu0
    %v181 = vadd.f32 %v78, %v180
    %182 = vmatprep.mubr.f32.mxu0 0.0
    %183 = vmatmul.mubr.f32.gmra.mrb[0].mxu0 %v89
    %v184 = vpop.f32.mrb[0].mxu0
    %v185 = vadd.f32 %v74, %v184
    %v186 = vpop.f32.mrb[0].mxu0
    %v187 = vadd.f32 %v78, %v186
    %188 = vmatprep.mubr.f32.mxu0 0.0
    %189 = vmatmul.mubr.f32.gmra.mrb[0].mxu0 %v92
    %v190 = vpop.f32.mrb[0].mxu0
    %v191 = vadd.f32 %v74, %v190
    %v192 = vpop.f32.mrb[0].mxu0
    %v193 = vadd.f32 %v78, %v192
    %194 = vmatprep.mubr.f32.mxu0 0.0
    %195 = vmatmul.mubr.f32.gmra.mrb[0].mxu0 %v95
    %v196 = vpop.f32.mrb[0].mxu0
    %v197 = vadd.f32 %v74, %v196
    %v198 = vpop.f32.mrb[0].mxu0
    %v199 = vadd.f32 %v78, %v198
    %200 = vmatprep.mubr.f32.mxu0 0.0
    %201 = vmatmul.mubr.f32.gmra.mrb[0].mxu0 %v98
    %v202 = vpop.f32.mrb[0].mxu0
    %v203 = vadd.f32 %v74, %v202
    %v204 = vpop.f32.mrb[0].mxu0
    %v205 = vadd.f32 %v78, %v204
    %206 = vmatprep.mubr.f32.mxu0 0.0
    %207 = vmatmul.mubr.f32.gmra.mrb[0].mxu0 %v101
    %v208 = vpop.f32.mrb[0].mxu0
    %v209 = vadd.f32 %v74, %v208
    %v210 = vpop.f32.mrb[0].mxu0
    %v211 = vadd.f32 %v78, %v210
    %212 = vmatprep.mubr.f32.mxu0 0.0
    %213 = vmatmul.mubr.f32.gmra.mrb[0].mxu0 %v104
    %v214 = vpop.f32.mrb[0].mxu0
    %v215 = vadd.f32 %v74, %v214
    %v216 = vpop.f32.mrb[0].mxu0
    %v217 = vadd.f32 %v78, %v216
    %218 = vdwg.mxu0
    %v219 = vmax.f32 %v173, 0.0
    %v220 = vmax.f32 %v175, 0.0
    %v221 = vmax.f32 %v179, 0.0
    %v222 = vmax.f32 %v181, 0.0
    %v223 = vmax.f32 %v185, 0.0
    %v224 = vmax.f32 %v187, 0.0
    %v225 = vmax.f32 %v191, 0.0
    %v226 = vmax.f32 %v193, 0.0
    %v227 = vmax.f32 %v197, 0.0
    %v228 = vmax.f32 %v199, 0.0
    %v229 = vmax.f32 %v203, 0.0
    %v230 = vmax.f32 %v205, 0.0
    %v231 = vmax.f32 %v209, 0.0
    %v232 = vmax.f32 %v211, 0.0
    %v233 = vmax.f32 %v215, 0.0
    %v234 = vmax.f32 %v217, 0.0
    %v235 = vld [vmem:[%s3] sm:$0xff]
    %v236 = vld [vmem:[%s3 + $0x8] sm:$0xff]
    %v237 = vld [vmem:[%s3 + $0x10] sm:$0xff]
    %v238 = vld [vmem:[%s3 + $0x18] sm:$0xff]
    %v239 = vld [vmem:[%s3 + $0x20] sm:$0xff]
    %v240 = vld [vmem:[%s3 + $0x28] sm:$0xff]
    %v241 = vld [vmem:[%s3 + $0x30] sm:$0xff]
    %v242 = vld [vmem:[%s3 + $0x38] sm:$0xff]
    %v243 = vld [vmem:[%s3 + $0x40] sm:$0xff]
    %v244 = vld [vmem:[%s3 + $0x48] sm:$0xff]
    %v245 = vld [vmem:[%s3 + $0x50] sm:$0xff]
    %v246 = vld [vmem:[%s3 + $0x58] sm:$0xff]
    %v247 = vld [vmem:[%s3 + $0x60] sm:$0xff]
    %v248 = vld [vmem:[%s3 + $0x68] sm:$0xff]
    %v249 = vld [vmem:[%s3 + $0x70] sm:$0xff]
    %v250 = vld [vmem:[%s3 + $0x78] sm:$0xff]
    %v251 = vld [vmem:[%s3 + $0x80] sm:$0xff]
    %v252 = vld [vmem:[%s3 + $0x88] sm:$0xff]
    %v253 = vld [vmem:[%s3 + $0x90] sm:$0xff]
    %v254 = vld [vmem:[%s3 + $0x98] sm:$0xff]
    %v255 = vld [vmem:[%s3 + $0xa0] sm:$0xff]
    %v256 = vld [vmem:[%s3 + $0xa8] sm:$0xff]
    %v257 = vld [vmem:[%s3 + $0xb0] sm:$0xff]
    %v258 = vld [vmem:[%s3 + $0xb8] sm:$0xff]
    %v259 = vld [vmem:[%s3 + $0xc0] sm:$0xff]
    %v260 = vld [vmem:[%s3 + $0xc8] sm:$0xff]
    %v261 = vld [vmem:[%s3 + $0xd0] sm:$0xff]
    %v262 = vld [vmem:[%s3 + $0xd8] sm:$0xff]
    %v263 = vld [vmem:[%s3 + $0xe0] sm:$0xff]
    %v264 = vld [vmem:[%s3 + $0xe8] sm:$0xff]
    %v265 = vld [vmem:[%s3 + $0xf0] sm:$0xff]
    %v266 = vld [vmem:[%s3 + $0xf8] sm:$0xff]
    %v267 = vld [vmem:[%s4] sm:$0x1]
    %v269 = vlaneseq
    %v270 = vshrl.u32 %v269, 7
    %v271 = vsub.s32 0, %v270
    %v272 = vrot.slane %v267, %v271
    %274 = vmatprep.subr.mxu0 0.0
    %275 = vmatpush1.msra.mxu0 %v235
    %276 = vmatprep.subr.mxu0 0.0
    %277 = vmatpush1.msra.mxu0 %v236
    %278 = vmatprep.subr.mxu0 0.0
    %279 = vmatpush1.msra.mxu0 %v237
    %280 = vmatprep.subr.mxu0 0.0
    %281 = vmatpush1.msra.mxu0 %v238
    %282 = vmatprep.subr.mxu0 0.0
    %283 = vmatpush1.msra.mxu0 %v239
    %284 = vmatprep.subr.mxu0 0.0
    %285 = vmatpush1.msra.mxu0 %v240
    %286 = vmatprep.subr.mxu0 0.0
    %287 = vmatpush1.msra.mxu0 %v241
    %288 = vmatprep.subr.mxu0 0.0
    %289 = vmatpush1.msra.mxu0 %v242
    %290 = vmatprep.subr.mxu0 0.0
    %291 = vmatpush1.msra.mxu0 %v243
    %292 = vmatprep.subr.mxu0 0.0
    %293 = vmatpush1.msra.mxu0 %v244
    %294 = vmatprep.subr.mxu0 0.0
    %295 = vmatpush1.msra.mxu0 %v245
    %296 = vmatprep.subr.mxu0 0.0
    %297 = vmatpush1.msra.mxu0 %v246
    %298 = vmatprep.subr.mxu0 0.0
    %299 = vmatpush1.msra.mxu0 %v247
    %300 = vmatprep.subr.mxu0 0.0
    %301 = vmatpush1.msra.mxu0 %v248
    %302 = vmatprep.subr.mxu0 0.0
    %303 = vmatpush1.msra.mxu0 %v249
    %304 = vmatprep.subr.mxu0 0.0
    %305 = vmatpush1.msra.mxu0 %v250
    %306 = vmatprep.subr.mxu0 0.0
    %307 = vmatpush1.msra.mxu0 %v251
    %308 = vmatprep.subr.mxu0 0.0
    %309 = vmatpush1.msra.mxu0 %v252
    %310 = vmatprep.subr.mxu0 0.0
    %311 = vmatpush1.msra.mxu0 %v253
    %312 = vmatprep.subr.mxu0 0.0
    %313 = vmatpush1.msra.mxu0 %v254
    %314 = vmatprep.subr.mxu0 0.0
    %315 = vmatpush1.msra.mxu0 %v255
    %316 = vmatprep.subr.mxu0 0.0
    %317 = vmatpush1.msra.mxu0 %v256
    %318 = vmatprep.subr.mxu0 0.0
    %319 = vmatpush1.msra.mxu0 %v257
    %320 = vmatprep.subr.mxu0 0.0
    %321 = vmatpush1.msra.mxu0 %v258
    %322 = vmatprep.subr.mxu0 0.0
    %323 = vmatpush1.msra.mxu0 %v259
    %324 = vmatprep.subr.mxu0 0.0
    %325 = vmatpush1.msra.mxu0 %v260
    %326 = vmatprep.subr.mxu0 0.0
    %327 = vmatpush1.msra.mxu0 %v261
    %328 = vmatprep.subr.mxu0 0.0
    %329 = vmatpush1.msra.mxu0 %v262
    %330 = vmatprep.subr.mxu0 0.0
    %331 = vmatpush1.msra.mxu0 %v263
    %332 = vmatprep.subr.mxu0 0.0
    %333 = vmatpush1.msra.mxu0 %v264
    %334 = vmatprep.subr.mxu0 0.0
    %335 = vmatpush1.msra.mxu0 %v265
    %336 = vmatprep.subr.mxu0 0.0
    %337 = vmatpush1.msra.mxu0 %v266
    %338 = vmatprep.mubr.f32.mxu0 %v220
    %339 = vmatmul.mubr.f32.gmra.mrb[0].mxu0 %v219
    %v340 = vpop.f32.mrb[0].mxu0
    %v341 = vadd.f32 %v272, %v340
    %v342 = vpop.f32.mrb[0].mxu0
    %343 = vmatprep.mubr.f32.mxu0 %v222
    %344 = vmatmul.mubr.f32.gmra.mrb[0].mxu0 %v221
    %v345 = vpop.f32.mrb[0].mxu0
    %v346 = vadd.f32 %v272, %v345
    %v347 = vpop.f32.mrb[0].mxu0
    %348 = vmatprep.mubr.f32.mxu0 %v224
    %349 = vmatmul.mubr.f32.gmra.mrb[0].mxu0 %v223
    %v350 = vpop.f32.mrb[0].mxu0
    %v351 = vadd.f32 %v272, %v350
    %v352 = vpop.f32.mrb[0].mxu0
    %353 = vmatprep.mubr.f32.mxu0 %v226
    %354 = vmatmul.mubr.f32.gmra.mrb[0].mxu0 %v225
    %v355 = vpop.f32.mrb[0].mxu0
    %v356 = vadd.f32 %v272, %v355
    %v357 = vpop.f32.mrb[0].mxu0
    %358 = vmatprep.mubr.f32.mxu0 %v228
    %359 = vmatmul.mubr.f32.gmra.mrb[0].mxu0 %v227
    %v360 = vpop.f32.mrb[0].mxu0
    %v361 = vadd.f32 %v272, %v360
    %v362 = vpop.f32.mrb[0].mxu0
    %363 = vmatprep.mubr.f32.mxu0 %v230
    %364 = vmatmul.mubr.f32.gmra.mrb[0].mxu0 %v229
    %v365 = vpop.f32.mrb[0].mxu0
    %v366 = vadd.f32 %v272, %v365
    %v367 = vpop.f32.mrb[0].mxu0
    %368 = vmatprep.mubr.f32.mxu0 %v232
    %369 = vmatmul.mubr.f32.gmra.mrb[0].mxu0 %v231
    %v370 = vpop.f32.mrb[0].mxu0
    %v371 = vadd.f32 %v272, %v370
    %v372 = vpop.f32.mrb[0].mxu0
    %373 = vmatprep.mubr.f32.mxu0 %v234
    %374 = vmatmul.mubr.f32.gmra.mrb[0].mxu0 %v233
    %v375 = vpop.f32.mrb[0].mxu0
    %v376 = vadd.f32 %v272, %v375
    %v377 = vpop.f32.mrb[0].mxu0
    %378 = vdwg.mxu0
    %v379 = vmax.f32 %v341, 0.0
    %v380 = vmax.f32 %v346, 0.0
    %v381 = vmax.f32 %v351, 0.0
    %v382 = vmax.f32 %v356, 0.0
    %v383 = vmax.f32 %v361, 0.0
    %v384 = vmax.f32 %v366, 0.0
    %v385 = vmax.f32 %v371, 0.0
    %v386 = vmax.f32 %v376, 0.0
    %v387 = vld [vmem:[%s5] sm:$0xff]
    %v388 = vld [vmem:[%s5 + $0x8] sm:$0xff]
    %v389 = vld [vmem:[%s5 + $0x10] sm:$0xff]
    %v390 = vld [vmem:[%s5 + $0x18] sm:$0xff]
    %v391 = vld [vmem:[%s5 + $0x20] sm:$0xff]
    %v392 = vld [vmem:[%s5 + $0x28] sm:$0xff]
    %v393 = vld [vmem:[%s5 + $0x30] sm:$0xff]
    %v394 = vld [vmem:[%s5 + $0x38] sm:$0xff]
    %v395 = vld [vmem:[%s5 + $0x40] sm:$0xff]
    %v396 = vld [vmem:[%s5 + $0x48] sm:$0xff]
    %v397 = vld [vmem:[%s5 + $0x50] sm:$0xff]
    %v398 = vld [vmem:[%s5 + $0x58] sm:$0xff]
    %v399 = vld [vmem:[%s5 + $0x60] sm:$0xff]
    %v400 = vld [vmem:[%s5 + $0x68] sm:$0xff]
    %v401 = vld [vmem:[%s5 + $0x70] sm:$0xff]
    %v402 = vld [vmem:[%s5 + $0x78] sm:$0xff]
    %v403 = vld [vmem:[%s6] sm:$0x1]
    %v405 = vlaneseq
    %v406 = vshrl.u32 %v405, 7
    %v407 = vsub.s32 0, %v406
    %v408 = vrot.slane %v403, %v407
    %410 = vmatprep.subr.mxu0 0.0
    %411 = vmatpush1.msra.mxu0 %v387
    %412 = vmatprep.subr.mxu0 0.0
    %413 = vmatpush1.msra.mxu0 %v388
    %414 = vmatprep.subr.mxu0 0.0
    %415 = vmatpush1.msra.mxu0 %v389
    %416 = vmatprep.subr.mxu0 0.0
    %417 = vmatpush1.msra.mxu0 %v390
    %418 = vmatprep.subr.mxu0 0.0
    %419 = vmatpush1.msra.mxu0 %v391
    %420 = vmatprep.subr.mxu0 0.0
    %421 = vmatpush1.msra.mxu0 %v392
    %422 = vmatprep.subr.mxu0 0.0
    %423 = vmatpush1.msra.mxu0 %v393
    %424 = vmatprep.subr.mxu0 0.0
    %425 = vmatpush1.msra.mxu0 %v394
    %426 = vmatprep.subr.mxu0 0.0
    %427 = vmatpush1.msra.mxu0 %v395
    %428 = vmatprep.subr.mxu0 0.0
    %429 = vmatpush1.msra.mxu0 %v396
    %430 = vmatprep.subr.mxu0 0.0
    %431 = vmatpush1.msra.mxu0 %v397
    %432 = vmatprep.subr.mxu0 0.0
    %433 = vmatpush1.msra.mxu0 %v398
    %434 = vmatprep.subr.mxu0 0.0
    %435 = vmatpush1.msra.mxu0 %v399
    %436 = vmatprep.subr.mxu0 0.0
    %437 = vmatpush1.msra.mxu0 %v400
    %438 = vmatprep.subr.mxu0 0.0
    %439 = vmatpush1.msra.mxu0 %v401
    %440 = vmatprep.subr.mxu0 0.0
    %441 = vmatpush1.msra.mxu0 %v402
    %442 = vmatprep.subr.mxu0 0.0
    %443 = vmatpush1.msra.mxu0 0.0
    %444 = vmatprep.subr.mxu0 0.0
    %445 = vmatpush1.msra.mxu0 0.0
    %446 = vmatprep.subr.mxu0 0.0
    %447 = vmatpush1.msra.mxu0 0.0
    %448 = vmatprep.subr.mxu0 0.0
    %449 = vmatpush1.msra.mxu0 0.0
    %450 = vmatprep.subr.mxu0 0.0
    %451 = vmatpush1.msra.mxu0 0.0
    %452 = vmatprep.subr.mxu0 0.0
    %453 = vmatpush1.msra.mxu0 0.0
    %454 = vmatprep.subr.mxu0 0.0
    %455 = vmatpush1.msra.mxu0 0.0
    %456 = vmatprep.subr.mxu0 0.0
    %457 = vmatpush1.msra.mxu0 0.0
    %458 = vmatprep.subr.mxu0 0.0
    %459 = vmatpush1.msra.mxu0 0.0
    %460 = vmatprep.subr.mxu0 0.0
    %461 = vmatpush1.msra.mxu0 0.0
    %462 = vmatprep.subr.mxu0 0.0
    %463 = vmatpush1.msra.mxu0 0.0
    %464 = vmatprep.subr.mxu0 0.0
    %465 = vmatpush1.msra.mxu0 0.0
    %466 = vmatprep.subr.mxu0 0.0
    %467 = vmatpush1.msra.mxu0 0.0
    %468 = vmatprep.subr.mxu0 0.0
    %469 = vmatpush1.msra.mxu0 0.0
    %470 = vmatprep.subr.mxu0 0.0
    %471 = vmatpush1.msra.mxu0 0.0
    %472 = vmatprep.subr.mxu0 0.0
    %473 = vmatpush1.msra.mxu0 0.0
    %474 = vmatprep.mubr.f32.mxu0 0.0
    %475 = vmatmul.mubr.f32.gmra.mrb[0].mxu0 %v379
    %v476 = vpop.f32.mrb[0].mxu0
    %v477 = vadd.f32 %v408, %v476
    %v478 = vpop.f32.mrb[0].mxu0
    %479 = vmatprep.mubr.f32.mxu0 0.0
    %480 = vmatmul.mubr.f32.gmra.mrb[0].mxu0 %v380
    %v481 = vpop.f32.mrb[0].mxu0
    %v482 = vadd.f32 %v408, %v481
    %v483 = vpop.f32.mrb[0].mxu0
    %484 = vmatprep.mubr.f32.mxu0 0.0
    %485 = vmatmul.mubr.f32.gmra.mrb[0].mxu0 %v381
    %v486 = vpop.f32.mrb[0].mxu0
    %v487 = vadd.f32 %v408, %v486
    %v488 = vpop.f32.mrb[0].mxu0
    %489 = vmatprep.mubr.f32.mxu0 0.0
    %490 = vmatmul.mubr.f32.gmra.mrb[0].mxu0 %v382
    %v491 = vpop.f32.mrb[0].mxu0
    %v492 = vadd.f32 %v408, %v491
    %v493 = vpop.f32.mrb[0].mxu0
    %494 = vmatprep.mubr.f32.mxu0 0.0
    %495 = vmatmul.mubr.f32.gmra.mrb[0].mxu0 %v383
    %v496 = vpop.f32.mrb[0].mxu0
    %v497 = vadd.f32 %v408, %v496
    %v498 = vpop.f32.mrb[0].mxu0
    %499 = vmatprep.mubr.f32.mxu0 0.0
    %500 = vmatmul.mubr.f32.gmra.mrb[0].mxu0 %v384
    %v501 = vpop.f32.mrb[0].mxu0
    %v502 = vadd.f32 %v408, %v501
    %v503 = vpop.f32.mrb[0].mxu0
    %504 = vmatprep.mubr.f32.mxu0 0.0
    %505 = vmatmul.mubr.f32.gmra.mrb[0].mxu0 %v385
    %v506 = vpop.f32.mrb[0].mxu0
    %v507 = vadd.f32 %v408, %v506
    %v508 = vpop.f32.mrb[0].mxu0
    %509 = vmatprep.mubr.f32.mxu0 0.0
    %510 = vmatmul.mubr.f32.gmra.mrb[0].mxu0 %v386
    %v511 = vpop.f32.mrb[0].mxu0
    %v512 = vadd.f32 %v408, %v511
    %v513 = vpop.f32.mrb[0].mxu0
    %514 = vdwg.mxu0
    %v515 = vmax.f32 %v477, 0.0
    %v516 = vmax.f32 %v482, 0.0
    %v517 = vmax.f32 %v487, 0.0
    %v518 = vmax.f32 %v492, 0.0
    %v519 = vmax.f32 %v497, 0.0
    %v520 = vmax.f32 %v502, 0.0
    %v521 = vmax.f32 %v507, 0.0
    %v522 = vmax.f32 %v512, 0.0
    %v523 = vld [vmem:[%s7] sm:$0xff]
    %v524 = vld [vmem:[%s7 + $0x8] sm:$0xff]
    %v525 = vld [vmem:[%s7 + $0x10] sm:$0xff]
    %v526 = vld [vmem:[%s7 + $0x18] sm:$0xff]
    %v527 = vld [vmem:[%s7 + $0x20] sm:$0xff]
    %v528 = vld [vmem:[%s7 + $0x28] sm:$0xff]
    %v529 = vld [vmem:[%s7 + $0x30] sm:$0xff]
    %v530 = vld [vmem:[%s7 + $0x38] sm:$0xff]
    %v531 = vld [vmem:[%s8] sm:$0x1]
    %v533 = vlaneseq
    %v534 = vshrl.u32 %v533, 7
    %v535 = vsub.s32 0, %v534
    %v536 = vrot.slane %v531, %v535
    %vm538 = vcmask 523264
    %v540 = vsel %vm538, %v515, 0
    %v543 = vsel %vm538, %v516, 0
    %v546 = vsel %vm538, %v517, 0
    %v549 = vsel %vm538, %v518, 0
    %v552 = vsel %vm538, %v519, 0
    %v555 = vsel %vm538, %v520, 0
    %v558 = vsel %vm538, %v521, 0
    %v561 = vsel %vm538, %v522, 0
    %563 = vmatprep.subr.mxu0 0.0
    %564 = vmatpush1.msra.mxu0 %v523
    %565 = vmatprep.subr.mxu0 0.0
    %566 = vmatpush1.msra.mxu0 %v524
    %567 = vmatprep.subr.mxu0 0.0
    %568 = vmatpush1.msra.mxu0 %v525
    %569 = vmatprep.subr.mxu0 0.0
    %570 = vmatpush1.msra.mxu0 %v526
    %571 = vmatprep.subr.mxu0 0.0
    %572 = vmatpush1.msra.mxu0 %v527
    %573 = vmatprep.subr.mxu0 0.0
    %574 = vmatpush1.msra.mxu0 %v528
    %575 = vmatprep.subr.mxu0 0.0
    %576 = vmatpush1.msra.mxu0 %v529
    %577 = vmatprep.subr.mxu0 0.0
    %578 = vmatpush1.msra.mxu0 %v530
    %579 = vmatprep.subr.mxu0 0.0
    %580 = vmatpush1.msra.mxu0 0.0
    %581 = vmatprep.subr.mxu0 0.0
    %582 = vmatpush1.msra.mxu0 0.0
    %583 = vmatprep.subr.mxu0 0.0
    %584 = vmatpush1.msra.mxu0 0.0
    %585 = vmatprep.subr.mxu0 0.0
    %586 = vmatpush1.msra.mxu0 0.0
    %587 = vmatprep.subr.mxu0 0.0
    %588 = vmatpush1.msra.mxu0 0.0
    %589 = vmatprep.subr.mxu0 0.0
    %590 = vmatpush1.msra.mxu0 0.0
    %591 = vmatprep.subr.mxu0 0.0
    %592 = vmatpush1.msra.mxu0 0.0
    %593 = vmatprep.subr.mxu0 0.0
    %594 = vmatpush1.msra.mxu0 0.0
    %595 = vmatprep.subr.mxu0 0.0
    %596 = vmatpush1.msra.mxu0 0.0
    %597 = vmatprep.subr.mxu0 0.0
    %598 = vmatpush1.msra.mxu0 0.0
    %599 = vmatprep.subr.mxu0 0.0
    %600 = vmatpush1.msra.mxu0 0.0
    %601 = vmatprep.subr.mxu0 0.0
    %602 = vmatpush1.msra.mxu0 0.0
    %603 = vmatprep.subr.mxu0 0.0
    %604 = vmatpush1.msra.mxu0 0.0
    %605 = vmatprep.subr.mxu0 0.0
    %606 = vmatpush1.msra.mxu0 0.0
    %607 = vmatprep.subr.mxu0 0.0
    %608 = vmatpush1.msra.mxu0 0.0
    %609 = vmatprep.subr.mxu0 0.0
    %610 = vmatpush1.msra.mxu0 0.0
    %611 = vmatprep.subr.mxu0 0.0
    %612 = vmatpush1.msra.mxu0 0.0
    %613 = vmatprep.subr.mxu0 0.0
    %614 = vmatpush1.msra.mxu0 0.0
    %615 = vmatprep.subr.mxu0 0.0
    %616 = vmatpush1.msra.mxu0 0.0
    %617 = vmatprep.subr.mxu0 0.0
    %618 = vmatpush1.msra.mxu0 0.0
    %619 = vmatprep.subr.mxu0 0.0
    %620 = vmatpush1.msra.mxu0 0.0
    %621 = vmatprep.subr.mxu0 0.0
    %622 = vmatpush1.msra.mxu0 0.0
    %623 = vmatprep.subr.mxu0 0.0
    %624 = vmatpush1.msra.mxu0 0.0
    %625 = vmatprep.subr.mxu0 0.0
    %626 = vmatpush1.msra.mxu0 0.0
    %627 = vmatprep.mubr.f32.mxu0 0.0
    %628 = vmatmul.mubr.f32.gmra.mrb[0].mxu0 %v540
    %v629 = vpop.f32.mrb[0].mxu0
    %v630 = vadd.f32 %v536, %v629
    %v631 = vpop.f32.mrb[0].mxu0
    %632 = vmatprep.mubr.f32.mxu0 0.0
    %633 = vmatmul.mubr.f32.gmra.mrb[0].mxu0 %v543
    %v634 = vpop.f32.mrb[0].mxu0
    %v635 = vadd.f32 %v536, %v634
    %v636 = vpop.f32.mrb[0].mxu0
    %637 = vmatprep.mubr.f32.mxu0 0.0
    %638 = vmatmul.mubr.f32.gmra.mrb[0].mxu0 %v546
    %v639 = vpop.f32.mrb[0].mxu0
    %v640 = vadd.f32 %v536, %v639
    %v641 = vpop.f32.mrb[0].mxu0
    %642 = vmatprep.mubr.f32.mxu0 0.0
    %643 = vmatmul.mubr.f32.gmra.mrb[0].mxu0 %v549
    %v644 = vpop.f32.mrb[0].mxu0
    %v645 = vadd.f32 %v536, %v644
    %v646 = vpop.f32.mrb[0].mxu0
    %647 = vmatprep.mubr.f32.mxu0 0.0
    %648 = vmatmul.mubr.f32.gmra.mrb[0].mxu0 %v552
    %v649 = vpop.f32.mrb[0].mxu0
    %v650 = vadd.f32 %v536, %v649
    %v651 = vpop.f32.mrb[0].mxu0
    %652 = vmatprep.mubr.f32.mxu0 0.0
    %653 = vmatmul.mubr.f32.gmra.mrb[0].mxu0 %v555
    %v654 = vpop.f32.mrb[0].mxu0
    %v655 = vadd.f32 %v536, %v654
    %v656 = vpop.f32.mrb[0].mxu0
    %657 = vmatprep.mubr.f32.mxu0 0.0
    %658 = vmatmul.mubr.f32.gmra.mrb[0].mxu0 %v558
    %v659 = vpop.f32.mrb[0].mxu0
    %v660 = vadd.f32 %v536, %v659
    %v661 = vpop.f32.mrb[0].mxu0
    %662 = vmatprep.mubr.f32.mxu0 0.0
    %663 = vmatmul.mubr.f32.gmra.mrb[0].mxu0 %v561
    %v664 = vpop.f32.mrb[0].mxu0
    %v665 = vadd.f32 %v536, %v664
    %v666 = vpop.f32.mrb[0].mxu0
    %667 = vdwg.mxu0
    %v668 = vmax.f32 %v630, 0.0
    %v669 = vmax.f32 %v635, 0.0
    %v670 = vmax.f32 %v640, 0.0
    %v671 = vmax.f32 %v645, 0.0
    %v672 = vmax.f32 %v650, 0.0
    %v673 = vmax.f32 %v655, 0.0
    %v674 = vmax.f32 %v660, 0.0
    %v675 = vmax.f32 %v665, 0.0
    %v676 = vld [vmem:[#allocation2] sm:$0xff]
    %v677 = vld [vmem:[#allocation2 + $0x8] sm:$0xff]
    %v678 = vld [vmem:[#allocation2 + $0x10] sm:$0xff]
    %v679 = vld [vmem:[#allocation2 + $0x18] sm:$0xff]
    %v680 = vld [vmem:[%s10] sm:$0x1]
    %v682 = vlaneseq
    %v683 = vshrl.u32 %v682, 7
    %v684 = vsub.s32 0, %v683
    %v685 = vrot.slane %v680, %v684
    %v688 = vsel %vm81, %v668, 0
    %v691 = vsel %vm81, %v669, 0
    %v694 = vsel %vm81, %v670, 0
    %v697 = vsel %vm81, %v671, 0
    %v700 = vsel %vm81, %v672, 0
    %v703 = vsel %vm81, %v673, 0
    %v706 = vsel %vm81, %v674, 0
    %v709 = vsel %vm81, %v675, 0
    %711 = vmatprep.subr.mxu0 0.0
    %712 = vmatpush1.msra.mxu0 %v676
    %713 = vmatprep.subr.mxu0 0.0
    %714 = vmatpush1.msra.mxu0 %v677
    %715 = vmatprep.subr.mxu0 0.0
    %716 = vmatpush1.msra.mxu0 %v678
    %717 = vmatprep.subr.mxu0 0.0
    %718 = vmatpush1.msra.mxu0 %v679
    %719 = vmatprep.subr.mxu0 0.0
    %720 = vmatpush1.msra.mxu0 0.0
    %721 = vmatprep.subr.mxu0 0.0
    %722 = vmatpush1.msra.mxu0 0.0
    %723 = vmatprep.subr.mxu0 0.0
    %724 = vmatpush1.msra.mxu0 0.0
    %725 = vmatprep.subr.mxu0 0.0
    %726 = vmatpush1.msra.mxu0 0.0
    %727 = vmatprep.subr.mxu0 0.0
    %728 = vmatpush1.msra.mxu0 0.0
    %729 = vmatprep.subr.mxu0 0.0
    %730 = vmatpush1.msra.mxu0 0.0
    %731 = vmatprep.subr.mxu0 0.0
    %732 = vmatpush1.msra.mxu0 0.0
    %733 = vmatprep.subr.mxu0 0.0
    %734 = vmatpush1.msra.mxu0 0.0
    %735 = vmatprep.subr.mxu0 0.0
    %736 = vmatpush1.msra.mxu0 0.0
    %737 = vmatprep.subr.mxu0 0.0
    %738 = vmatpush1.msra.mxu0 0.0
    %739 = vmatprep.subr.mxu0 0.0
    %740 = vmatpush1.msra.mxu0 0.0
    %741 = vmatprep.subr.mxu0 0.0
    %742 = vmatpush1.msra.mxu0 0.0
    %743 = vmatprep.subr.mxu0 0.0
    %744 = vmatpush1.msra.mxu0 0.0
    %745 = vmatprep.subr.mxu0 0.0
    %746 = vmatpush1.msra.mxu0 0.0
    %747 = vmatprep.subr.mxu0 0.0
    %748 = vmatpush1.msra.mxu0 0.0
    %749 = vmatprep.subr.mxu0 0.0
    %750 = vmatpush1.msra.mxu0 0.0
    %751 = vmatprep.subr.mxu0 0.0
    %752 = vmatpush1.msra.mxu0 0.0
    %753 = vmatprep.subr.mxu0 0.0
    %754 = vmatpush1.msra.mxu0 0.0
    %755 = vmatprep.subr.mxu0 0.0
    %756 = vmatpush1.msra.mxu0 0.0
    %757 = vmatprep.subr.mxu0 0.0
    %758 = vmatpush1.msra.mxu0 0.0
    %759 = vmatprep.subr.mxu0 0.0
    %760 = vmatpush1.msra.mxu0 0.0
    %761 = vmatprep.subr.mxu0 0.0
    %762 = vmatpush1.msra.mxu0 0.0
    %763 = vmatprep.subr.mxu0 0.0
    %764 = vmatpush1.msra.mxu0 0.0
    %765 = vmatprep.subr.mxu0 0.0
    %766 = vmatpush1.msra.mxu0 0.0
    %767 = vmatprep.subr.mxu0 0.0
    %768 = vmatpush1.msra.mxu0 0.0
    %769 = vmatprep.subr.mxu0 0.0
    %770 = vmatpush1.msra.mxu0 0.0
    %771 = vmatprep.subr.mxu0 0.0
    %772 = vmatpush1.msra.mxu0 0.0
    %773 = vmatprep.subr.mxu0 0.0
    %774 = vmatpush1.msra.mxu0 0.0
    %775 = vmatprep.mubr.f32.mxu0 0.0
    %776 = vmatmul.mubr.f32.gmra.mrb[0].mxu0 %v688
    %v777 = vpop.f32.mrb[0].mxu0
    %v778 = vadd.f32 %v685, %v777
    %v779 = vpop.f32.mrb[0].mxu0
    %780 = vmatprep.mubr.f32.mxu0 0.0
    %781 = vmatmul.mubr.f32.gmra.mrb[0].mxu0 %v691
    %v782 = vpop.f32.mrb[0].mxu0
    %v783 = vadd.f32 %v685, %v782
    %v784 = vpop.f32.mrb[0].mxu0
    %785 = vmatprep.mubr.f32.mxu0 0.0
    %786 = vmatmul.mubr.f32.gmra.mrb[0].mxu0 %v694
    %v787 = vpop.f32.mrb[0].mxu0
    %v788 = vadd.f32 %v685, %v787
    %v789 = vpop.f32.mrb[0].mxu0
    %790 = vmatprep.mubr.f32.mxu0 0.0
    %791 = vmatmul.mubr.f32.gmra.mrb[0].mxu0 %v697
    %v792 = vpop.f32.mrb[0].mxu0
    %v793 = vadd.f32 %v685, %v792
    %v794 = vpop.f32.mrb[0].mxu0
    %795 = vmatprep.mubr.f32.mxu0 0.0
    %796 = vmatmul.mubr.f32.gmra.mrb[0].mxu0 %v700
    %v797 = vpop.f32.mrb[0].mxu0
    %v798 = vadd.f32 %v685, %v797
    %v799 = vpop.f32.mrb[0].mxu0
    %800 = vmatprep.mubr.f32.mxu0 0.0
    %801 = vmatmul.mubr.f32.gmra.mrb[0].mxu0 %v703
    %v802 = vpop.f32.mrb[0].mxu0
    %v803 = vadd.f32 %v685, %v802
    %v804 = vpop.f32.mrb[0].mxu0
    %805 = vmatprep.mubr.f32.mxu0 0.0
    %806 = vmatmul.mubr.f32.gmra.mrb[0].mxu0 %v706
    %v807 = vpop.f32.mrb[0].mxu0
    %v808 = vadd.f32 %v685, %v807
    %v809 = vpop.f32.mrb[0].mxu0
    %810 = vmatprep.mubr.f32.mxu0 0.0
    %811 = vmatmul.mubr.f32.gmra.mrb[0].mxu0 %v709
    %v812 = vpop.f32.mrb[0].mxu0
    %v813 = vadd.f32 %v685, %v812
    %v814 = vpop.f32.mrb[0].mxu0
    %815 = vdwg.mxu0
    %816 = vst [vmem:[#allocation5] sm:$0xff] %v778
    %817 = vst [vmem:[#allocation5 + $0x8] sm:$0xff] %v783
    %818 = vst [vmem:[#allocation5 + $0x10] sm:$0xff] %v788
    %819 = vst [vmem:[#allocation5 + $0x18] sm:$0xff] %v793
    %820 = vst [vmem:[#allocation5 + $0x20] sm:$0xff] %v798
    %821 = vst [vmem:[#allocation5 + $0x28] sm:$0xff] %v803
    %822 = vst [vmem:[#allocation5 + $0x30] sm:$0xff] %v808
    %823 = vst [vmem:[#allocation5 + $0x38] sm:$0xff] %v813
    // Predicated region
    $region50: #{tpu_custom_call.1} parent=1 // pred_check
      _
    $region51: #{tpu_custom_call.1} parent=1 // pred_check_branch
      %825 = sbr.rel (0) target = $region53
    $region52: #{tpu_custom_call.1} parent=1 // pred_region
      %s827 = ssub.s32 1024, 1024
      %828 = vsyncadd [#allocation4], %s827
      %s829 = sshll.u32 [#allocation5], 4
      %s830 = int_to_ptr.vmem [resolvable:$true] %s829
      %835 = dma.vmem_to_hbm [thread:$0]  %s830, 1024, %s11, [#allocation4], 128, 128, 8
    $region53: #{tpu_custom_call.1} parent=1 // pred_fallthru
      _
    // Predicated region
    $region54: #{tpu_custom_call.1} parent=1 // pred_check
      _
    $region55: #{tpu_custom_call.1} parent=1 // pred_check_branch
      %837 = sbr.rel (0) target = $region57
    $region56: #{tpu_custom_call.1} parent=1 // pred_region
      %838 = dma.done [#allocation4], 1024
    $region57: #{tpu_custom_call.1} parent=1 // pred_fallthru
      _
    %839 = vsyncpa [#allocation3], 1
    %840 = vsyncpa [#allocation4], 1

// kernel: tpu_custom_call.1
$region0: #{tpu_custom_call.1}
  #allocation0 [shape = 'u32[]', space=smem, size = 0x4, offset = 0x4, fixed_abs, tag = 'smem constant byte address 0x4 - core index']
  #allocation1 [shape = 'u32[144,128]{1,0:T(1,128)}', space=vmem, size = 0x12000, scoped, tag = 'internal scratch']
  %s0 = inlined_call_operand.vmem [shape: f32[64,32], index: 0, kind: input, shape index: {}]
  %s1 = inlined_call_operand.vmem [shape: f32[32,256], index: 1, kind: input, shape index: {}]
  %s2 = inlined_call_operand.vmem [shape: f32[1,256], index: 2, kind: input, shape index: {}]
  %s3 = inlined_call_operand.vmem [shape: f32[256,128], index: 3, kind: input, shape index: {}]
  %s4 = inlined_call_operand.vmem [shape: f32[1,128], index: 4, kind: input, shape index: {}]
  %s5 = inlined_call_operand.vmem [shape: f32[128,64], index: 5, kind: input, shape index: {}]
  %s6 = inlined_call_operand.vmem [shape: f32[1,64], index: 6, kind: input, shape index: {}]
  %s7 = inlined_call_operand.vmem [shape: f32[64,32], index: 7, kind: input, shape index: {}]
  %s8 = inlined_call_operand.vmem [shape: f32[1,32], index: 8, kind: input, shape index: {}]
  %s9 = inlined_call_operand.hbm [shape: f32[32,128], index: 9, kind: input, shape index: {}]
  %s10 = inlined_call_operand.vmem [shape: f32[1,128], index: 10, kind: input, shape index: {}]
  %s11 = inlined_call_operand.hbm [shape: f32[64,128], index: 11, kind: output, shape index: {}]
  %s12 = sld [smem:[#allocation0]]
  $region58: #{tpu_custom_call.1} parent=0
    _
  %s14 = ssub.s32 1, %s12
  %s15 = scalar_select 0, %s14, %s12
  $region1: #{tpu_custom_call.1} parent=0
    #allocation2 [shape = 'u8[16384]{0}', space=vmem, size = 0x4000, scoped, tag = 'input window, operand 9, single buffered']
    #allocation3 [shape = 's32[1]{0}', space=sflag, size = 0x4, scoped, tag = 'scoped memory for tpu_custom_call.1']
    #allocation4 [shape = 's32[1]{0}', space=sflag, size = 0x4, scoped, tag = 'scoped memory for tpu_custom_call.1']
    #allocation5 [shape = 'u8[32768]{0}', space=vmem, size = 0x8000, scoped, tag = 'output window, operand 0, single buffered']
    %16 = vsyncpa [#allocation3], 0
    %17 = vsyncpa [#allocation4], 0
    // Predicated region
    $region2: #{tpu_custom_call.1} parent=1 // pred_check
      _
    $region3: #{tpu_custom_call.1} parent=1 // pred_check_branch
      %19 = sbr.rel (0) target = $region5
    $region4: #{tpu_custom_call.1} parent=1 // pred_region
      _
    $region5: #{tpu_custom_call.1} parent=1 // pred_fallthru
      _
    // Predicated region
    $region6: #{tpu_custom_call.1} parent=1 // pred_check
      _
    $region7: #{tpu_custom_call.1} parent=1 // pred_check_branch
      %21 = sbr.rel (0) target = $region9
    $region8: #{tpu_custom_call.1} parent=1 // pred_region
      _
    $region9: #{tpu_custom_call.1} parent=1 // pred_fallthru
      _
    // Predicated region
    $region10: #{tpu_custom_call.1} parent=1 // pred_check
      _
    $region11: #{tpu_custom_call.1} parent=1 // pred_check_branch
      %23 = sbr.rel (0) target = $region13
    $region12: #{tpu_custom_call.1} parent=1 // pred_region
      _
    $region13: #{tpu_custom_call.1} parent=1 // pred_fallthru
      _
    // Predicated region
    $region14: #{tpu_custom_call.1} parent=1 // pred_check
      _
    $region15: #{tpu_custom_call.1} parent=1 // pred_check_branch
      %25 = sbr.rel (0) target = $region17
    $region16: #{tpu_custom_call.1} parent=1 // pred_region
      _
    $region17: #{tpu_custom_call.1} parent=1 // pred_fallthru
      _
    // Predicated region
    $region18: #{tpu_custom_call.1} parent=1 // pred_check
      _
    $region19: #{tpu_custom_call.1} parent=1 // pred_check_branch
      %27 = sbr.rel (0) target = $region21
    $region20: #{tpu_custom_call.1} parent=1 // pred_region
      _
    $region21: #{tpu_custom_call.1} parent=1 // pred_fallthru
      _
    // Predicated region
    $region22: #{tpu_custom_call.1} parent=1 // pred_check
      _
    $region23: #{tpu_custom_call.1} parent=1 // pred_check_branch
      %29 = sbr.rel (0) target = $region25
    $region24: #{tpu_custom_call.1} parent=1 // pred_region
      _
    $region25: #{tpu_custom_call.1} parent=1 // pred_fallthru
      _
    // Predicated region
    $region26: #{tpu_custom_call.1} parent=1 // pred_check
      _
    $region27: #{tpu_custom_call.1} parent=1 // pred_check_branch
      %31 = sbr.rel (0) target = $region29
    $region28: #{tpu_custom_call.1} parent=1 // pred_region
      _
    $region29: #{tpu_custom_call.1} parent=1 // pred_fallthru
      _
    // Predicated region
    $region30: #{tpu_custom_call.1} parent=1 // pred_check
      _
    $region31: #{tpu_custom_call.1} parent=1 // pred_check_branch
      %33 = sbr.rel (0) target = $region33
    $region32: #{tpu_custom_call.1} parent=1 // pred_region
      _
    $region33: #{tpu_custom_call.1} parent=1 // pred_fallthru
      _
    // Predicated region
    $region34: #{tpu_custom_call.1} parent=1 // pred_check
      _
    $region35: #{tpu_custom_call.1} parent=1 // pred_check_branch
      %35 = sbr.rel (0) target = $region37
    $region36: #{tpu_custom_call.1} parent=1 // pred_region
      _
    $region37: #{tpu_custom_call.1} parent=1 // pred_fallthru
      _
    // Predicated region
    $region38: #{tpu_custom_call.1} parent=1 // pred_check
      _
    $region39: #{tpu_custom_call.1} parent=1 // pred_check_branch
      %37 = sbr.rel (0) target = $region41
    $region40: #{tpu_custom_call.1} parent=1 // pred_region
      %s39 = ssub.s32 512, 512
      %40 = vsyncadd [#allocation3], %s39
      %s41 = sshll.u32 [#allocation2], 4
      %s42 = int_to_ptr.vmem [resolvable:$true] %s41
      %47 = dma.hbm_to_vmem [thread:$0]  %s9, 512, %s42, [#allocation3], 128, 128, 8
    $region41: #{tpu_custom_call.1} parent=1 // pred_fallthru
      _
    // Predicated region
    $region42: #{tpu_custom_call.1} parent=1 // pred_check
      _
    $region43: #{tpu_custom_call.1} parent=1 // pred_check_branch
      %49 = sbr.rel (0) target = $region45
    $region44: #{tpu_custom_call.1} parent=1 // pred_region
      _
    $region45: #{tpu_custom_call.1} parent=1 // pred_fallthru
      _
    // Predicated region
    $region46: #{tpu_custom_call.1} parent=1 // pred_check
      _
    $region47: #{tpu_custom_call.1} parent=1 // pred_check_branch
      %51 = sbr.rel (0) target = $region49
    $region48: #{tpu_custom_call.1} parent=1 // pred_region
      %52 = dma.done [#allocation3], 512
    $region49: #{tpu_custom_call.1} parent=1 // pred_fallthru
      _
    %v53 = vld [vmem:[%s0] sm:$0xff]
    %v54 = vld [vmem:[%s0 + $0x8] sm:$0xff]
    %v55 = vld [vmem:[%s0 + $0x10] sm:$0xff]
    %v56 = vld [vmem:[%s0 + $0x18] sm:$0xff]
    %v57 = vld [vmem:[%s0 + $0x20] sm:$0xff]
    %v58 = vld [vmem:[%s0 + $0x28] sm:$0xff]
    %v59 = vld [vmem:[%s0 + $0x30] sm:$0xff]
    %v60 = vld [vmem:[%s0 + $0x38] sm:$0xff]
    %v61 = vld [vmem:[%s1] sm:$0xff]
    %v62 = vld [vmem:[%s1 + $0x8] sm:$0xff]
    %v63 = vld [vmem:[%s1 + $0x10] sm:$0xff]
    %v64 = vld [vmem:[%s1 + $0x18] sm:$0xff]
    %v65 = vld [vmem:[%s1 + $0x20] sm:$0xff]
    %v66 = vld [vmem:[%s1 + $0x28] sm:$0xff]
    %v67 = vld [vmem:[%s1 + $0x30] sm:$0xff]
    %v68 = vld [vmem:[%s1 + $0x38] sm:$0xff]
    %v69 = vld [vmem:[%s2] sm:$0x3]
    %v71 = vlaneseq
    %v72 = vshrl.u32 %v71, 7
    %v73 = vsub.s32 0, %v72
    %v74 = vrot.slane %v69, %v73
    %v75 = vlaneseq
    %v76 = vshrl.u32 %v75, 7
    %v77 = vsub.s32 1, %v76
    %v78 = vrot.slane %v69, %v77
    %vm81 = vcmask 261120
    %v83 = vsel %vm81, %v53, 0
    %v86 = vsel %vm81, %v54, 0
    %v89 = vsel %vm81, %v55, 0
    %v92 = vsel %vm81, %v56, 0
    %v95 = vsel %vm81, %v57, 0
    %v98 = vsel %vm81, %v58, 0
    %v101 = vsel %vm81, %v59, 0
    %v104 = vsel %vm81, %v60, 0
    %106 = vmatprep.subr.mxu0 %v62
    %107 = vmatpush1.msra.mxu0 %v61
    %108 = vmatprep.subr.mxu0 %v64
    %109 = vmatpush1.msra.mxu0 %v63
    %110 = vmatprep.subr.mxu0 %v66
    %111 = vmatpush1.msra.mxu0 %v65
    %112 = vmatprep.subr.mxu0 %v68
    %113 = vmatpush1.msra.mxu0 %v67
    %114 = vmatprep.subr.mxu0 0.0
    %115 = vmatpush1.msra.mxu0 0.0
    %116 = vmatprep.subr.mxu0 0.0
    %117 = vmatpush1.msra.mxu0 0.0
    %118 = vmatprep.subr.mxu0 0.0
    %119 = vmatpush1.msra.mxu0 0.0
    %120 = vmatprep.subr.mxu0 0.0
    %121 = vmatpush1.msra.mxu0 0.0
    %122 = vmatprep.subr.mxu0 0.0
    %123 = vmatpush1.msra.mxu0 0.0
    %124 = vmatprep.subr.mxu0 0.0
    %125 = vmatpush1.msra.mxu0 0.0
    %126 = vmatprep.subr.mxu0 0.0
    %127 = vmatpush1.msra.mxu0 0.0
    %128 = vmatprep.subr.mxu0 0.0
    %129 = vmatpush1.msra.mxu0 0.0
    %130 = vmatprep.subr.mxu0 0.0
    %131 = vmatpush1.msra.mxu0 0.0
    %132 = vmatprep.subr.mxu0 0.0
    %133 = vmatpush1.msra.mxu0 0.0
    %134 = vmatprep.subr.mxu0 0.0
    %135 = vmatpush1.msra.mxu0 0.0
    %136 = vmatprep.subr.mxu0 0.0
    %137 = vmatpush1.msra.mxu0 0.0
    %138 = vmatprep.subr.mxu0 0.0
    %139 = vmatpush1.msra.mxu0 0.0
    %140 = vmatprep.subr.mxu0 0.0
    %141 = vmatpush1.msra.mxu0 0.0
    %142 = vmatprep.subr.mxu0 0.0
    %143 = vmatpush1.msra.mxu0 0.0
    %144 = vmatprep.subr.mxu0 0.0
    %145 = vmatpush1.msra.mxu0 0.0
    %146 = vmatprep.subr.mxu0 0.0
    %147 = vmatpush1.msra.mxu0 0.0
    %148 = vmatprep.subr.mxu0 0.0
    %149 = vmatpush1.msra.mxu0 0.0
    %150 = vmatprep.subr.mxu0 0.0
    %151 = vmatpush1.msra.mxu0 0.0
    %152 = vmatprep.subr.mxu0 0.0
    %153 = vmatpush1.msra.mxu0 0.0
    %154 = vmatprep.subr.mxu0 0.0
    %155 = vmatpush1.msra.mxu0 0.0
    %156 = vmatprep.subr.mxu0 0.0
    %157 = vmatpush1.msra.mxu0 0.0
    %158 = vmatprep.subr.mxu0 0.0
    %159 = vmatpush1.msra.mxu0 0.0
    %160 = vmatprep.subr.mxu0 0.0
    %161 = vmatpush1.msra.mxu0 0.0
    %162 = vmatprep.subr.mxu0 0.0
    %163 = vmatpush1.msra.mxu0 0.0
    %164 = vmatprep.subr.mxu0 0.0
    %165 = vmatpush1.msra.mxu0 0.0
    %166 = vmatprep.subr.mxu0 0.0
    %167 = vmatpush1.msra.mxu0 0.0
    %168 = vmatprep.subr.mxu0 0.0
    %169 = vmatpush1.msra.mxu0 0.0
    %170 = vmatprep.mubr.f32.mxu0 0.0
    %171 = vmatmul.mubr.f32.gmra.mrb[0].mxu0 %v83
    %v172 = vpop.f32.mrb[0].mxu0
    %v173 = vadd.f32 %v74, %v172
    %v174 = vpop.f32.mrb[0].mxu0
    %v175 = vadd.f32 %v78, %v174
    %176 = vmatprep.mubr.f32.mxu0 0.0
    %177 = vmatmul.mubr.f32.gmra.mrb[0].mxu0 %v86
    %v178 = vpop.f32.mrb[0].mxu0
    %v179 = vadd.f32 %v74, %v178
    %v180 = vpop.f32.mrb[0].mxu0
    %v181 = vadd.f32 %v78, %v180
    %182 = vmatprep.mubr.f32.mxu0 0.0
    %183 = vmatmul.mubr.f32.gmra.mrb[0].mxu0 %v89
    %v184 = vpop.f32.mrb[0].mxu0
    %v185 = vadd.f32 %v74, %v184
    %v186 = vpop.f32.mrb[0].mxu0
    %v187 = vadd.f32 %v78, %v186
    %188 = vmatprep.mubr.f32.mxu0 0.0
    %189 = vmatmul.mubr.f32.gmra.mrb[0].mxu0 %v92
    %v190 = vpop.f32.mrb[0].mxu0
    %v191 = vadd.f32 %v74, %v190
    %v192 = vpop.f32.mrb[0].mxu0
    %v193 = vadd.f32 %v78, %v192
    %194 = vmatprep.mubr.f32.mxu0 0.0
    %195 = vmatmul.mubr.f32.gmra.mrb[0].mxu0 %v95
    %v196 = vpop.f32.mrb[0].mxu0
    %v197 = vadd.f32 %v74, %v196
    %v198 = vpop.f32.mrb[0].mxu0
    %v199 = vadd.f32 %v78, %v198
    %200 = vmatprep.mubr.f32.mxu0 0.0
    %201 = vmatmul.mubr.f32.gmra.mrb[0].mxu0 %v98
    %v202 = vpop.f32.mrb[0].mxu0
    %v203 = vadd.f32 %v74, %v202
    %v204 = vpop.f32.mrb[0].mxu0
    %v205 = vadd.f32 %v78, %v204
    %206 = vmatprep.mubr.f32.mxu0 0.0
    %207 = vmatmul.mubr.f32.gmra.mrb[0].mxu0 %v101
    %v208 = vpop.f32.mrb[0].mxu0
    %v209 = vadd.f32 %v74, %v208
    %v210 = vpop.f32.mrb[0].mxu0
    %v211 = vadd.f32 %v78, %v210
    %212 = vmatprep.mubr.f32.mxu0 0.0
    %213 = vmatmul.mubr.f32.gmra.mrb[0].mxu0 %v104
    %v214 = vpop.f32.mrb[0].mxu0
    %v215 = vadd.f32 %v74, %v214
    %v216 = vpop.f32.mrb[0].mxu0
    %v217 = vadd.f32 %v78, %v216
    %218 = vdwg.mxu0
    %v219 = vmax.f32 %v173, 0.0
    %v220 = vmax.f32 %v175, 0.0
    %v221 = vmax.f32 %v179, 0.0
    %v222 = vmax.f32 %v181, 0.0
    %v223 = vmax.f32 %v185, 0.0
    %v224 = vmax.f32 %v187, 0.0
    %v225 = vmax.f32 %v191, 0.0
    %v226 = vmax.f32 %v193, 0.0
    %v227 = vmax.f32 %v197, 0.0
    %v228 = vmax.f32 %v199, 0.0
    %v229 = vmax.f32 %v203, 0.0
    %v230 = vmax.f32 %v205, 0.0
    %v231 = vmax.f32 %v209, 0.0
    %v232 = vmax.f32 %v211, 0.0
    %v233 = vmax.f32 %v215, 0.0
    %v234 = vmax.f32 %v217, 0.0
    %v235 = vld [vmem:[%s3] sm:$0xff]
    %v236 = vld [vmem:[%s3 + $0x8] sm:$0xff]
    %v237 = vld [vmem:[%s3 + $0x10] sm:$0xff]
    %v238 = vld [vmem:[%s3 + $0x18] sm:$0xff]
    %v239 = vld [vmem:[%s3 + $0x20] sm:$0xff]
    %v240 = vld [vmem:[%s3 + $0x28] sm:$0xff]
    %v241 = vld [vmem:[%s3 + $0x30] sm:$0xff]
    %v242 = vld [vmem:[%s3 + $0x38] sm:$0xff]
    %v243 = vld [vmem:[%s3 + $0x40] sm:$0xff]
    %v244 = vld [vmem:[%s3 + $0x48] sm:$0xff]
    %v245 = vld [vmem:[%s3 + $0x50] sm:$0xff]
    %v246 = vld [vmem:[%s3 + $0x58] sm:$0xff]
    %v247 = vld [vmem:[%s3 + $0x60] sm:$0xff]
    %v248 = vld [vmem:[%s3 + $0x68] sm:$0xff]
    %v249 = vld [vmem:[%s3 + $0x70] sm:$0xff]
    %v250 = vld [vmem:[%s3 + $0x78] sm:$0xff]
    %v251 = vld [vmem:[%s3 + $0x80] sm:$0xff]
    %v252 = vld [vmem:[%s3 + $0x88] sm:$0xff]
    %v253 = vld [vmem:[%s3 + $0x90] sm:$0xff]
    %v254 = vld [vmem:[%s3 + $0x98] sm:$0xff]
    %v255 = vld [vmem:[%s3 + $0xa0] sm:$0xff]
    %v256 = vld [vmem:[%s3 + $0xa8] sm:$0xff]
    %v257 = vld [vmem:[%s3 + $0xb0] sm:$0xff]
    %v258 = vld [vmem:[%s3 + $0xb8] sm:$0xff]
    %v259 = vld [vmem:[%s3 + $0xc0] sm:$0xff]
    %v260 = vld [vmem:[%s3 + $0xc8] sm:$0xff]
    %v261 = vld [vmem:[%s3 + $0xd0] sm:$0xff]
    %v262 = vld [vmem:[%s3 + $0xd8] sm:$0xff]
    %v263 = vld [vmem:[%s3 + $0xe0] sm:$0xff]
    %v264 = vld [vmem:[%s3 + $0xe8] sm:$0xff]
    %v265 = vld [vmem:[%s3 + $0xf0] sm:$0xff]
    %v266 = vld [vmem:[%s3 + $0xf8] sm:$0xff]
    %v267 = vld [vmem:[%s4] sm:$0x1]
    %v269 = vlaneseq
    %v270 = vshrl.u32 %v269, 7
    %v271 = vsub.s32 0, %v270
    %v272 = vrot.slane %v267, %v271
    %274 = vmatprep.subr.mxu0 0.0
    %275 = vmatpush1.msra.mxu0 %v235
    %276 = vmatprep.subr.mxu0 0.0
    %277 = vmatpush1.msra.mxu0 %v236
    %278 = vmatprep.subr.mxu0 0.0
    %279 = vmatpush1.msra.mxu0 %v237
    %280 = vmatprep.subr.mxu0 0.0
    %281 = vmatpush1.msra.mxu0 %v238
    %282 = vmatprep.subr.mxu0 0.0
    %283 = vmatpush1.msra.mxu0 %v239
    %284 = vmatprep.subr.mxu0 0.0
    %285 = vmatpush1.msra.mxu0 %v240
    %286 = vmatprep.subr.mxu0 0.0
    %287 = vmatpush1.msra.mxu0 %v241
    %288 = vmatprep.subr.mxu0 0.0
    %289 = vmatpush1.msra.mxu0 %v242
    %290 = vmatprep.subr.mxu0 0.0
    %291 = vmatpush1.msra.mxu0 %v243
    %292 = vmatprep.subr.mxu0 0.0
    %293 = vmatpush1.msra.mxu0 %v244
    %294 = vmatprep.subr.mxu0 0.0
    %295 = vmatpush1.msra.mxu0 %v245
    %296 = vmatprep.subr.mxu0 0.0
    %297 = vmatpush1.msra.mxu0 %v246
    %298 = vmatprep.subr.mxu0 0.0
    %299 = vmatpush1.msra.mxu0 %v247
    %300 = vmatprep.subr.mxu0 0.0
    %301 = vmatpush1.msra.mxu0 %v248
    %302 = vmatprep.subr.mxu0 0.0
    %303 = vmatpush1.msra.mxu0 %v249
    %304 = vmatprep.subr.mxu0 0.0
    %305 = vmatpush1.msra.mxu0 %v250
    %306 = vmatprep.subr.mxu0 0.0
    %307 = vmatpush1.msra.mxu0 %v251
    %308 = vmatprep.subr.mxu0 0.0
    %309 = vmatpush1.msra.mxu0 %v252
    %310 = vmatprep.subr.mxu0 0.0
    %311 = vmatpush1.msra.mxu0 %v253
    %312 = vmatprep.subr.mxu0 0.0
    %313 = vmatpush1.msra.mxu0 %v254
    %314 = vmatprep.subr.mxu0 0.0
    %315 = vmatpush1.msra.mxu0 %v255
    %316 = vmatprep.subr.mxu0 0.0
    %317 = vmatpush1.msra.mxu0 %v256
    %318 = vmatprep.subr.mxu0 0.0
    %319 = vmatpush1.msra.mxu0 %v257
    %320 = vmatprep.subr.mxu0 0.0
    %321 = vmatpush1.msra.mxu0 %v258
    %322 = vmatprep.subr.mxu0 0.0
    %323 = vmatpush1.msra.mxu0 %v259
    %324 = vmatprep.subr.mxu0 0.0
    %325 = vmatpush1.msra.mxu0 %v260
    %326 = vmatprep.subr.mxu0 0.0
    %327 = vmatpush1.msra.mxu0 %v261
    %328 = vmatprep.subr.mxu0 0.0
    %329 = vmatpush1.msra.mxu0 %v262
    %330 = vmatprep.subr.mxu0 0.0
    %331 = vmatpush1.msra.mxu0 %v263
    %332 = vmatprep.subr.mxu0 0.0
    %333 = vmatpush1.msra.mxu0 %v264
    %334 = vmatprep.subr.mxu0 0.0
    %335 = vmatpush1.msra.mxu0 %v265
    %336 = vmatprep.subr.mxu0 0.0
    %337 = vmatpush1.msra.mxu0 %v266
    %338 = vmatprep.mubr.f32.mxu0 %v220
    %339 = vmatmul.mubr.f32.gmra.mrb[0].mxu0 %v219
    %v340 = vpop.f32.mrb[0].mxu0
    %v341 = vadd.f32 %v272, %v340
    %v342 = vpop.f32.mrb[0].mxu0
    %343 = vmatprep.mubr.f32.mxu0 %v222
    %344 = vmatmul.mubr.f32.gmra.mrb[0].mxu0 %v221
    %v345 = vpop.f32.mrb[0].mxu0
    %v346 = vadd.f32 %v272, %v345
    %v347 = vpop.f32.mrb[0].mxu0
    %348 = vmatprep.mubr.f32.mxu0 %v224
    %349 = vmatmul.mubr.f32.gmra.mrb[0].mxu0 %v223
    %v350 = vpop.f32.mrb[0].mxu0
    %v351 = vadd.f32 %v272, %v350
    %v352 = vpop.f32.mrb[0].mxu0
    %353 = vmatprep.mubr.f32.mxu0 %v226
    %354 = vmatmul.mubr.f32.gmra.mrb[0].mxu0 %v225
    %v355 = vpop.f32.mrb[0].mxu0
    %v356 = vadd.f32 %v272, %v355
    %v357 = vpop.f32.mrb[0].mxu0
    %358 = vmatprep.mubr.f32.mxu0 %v228
    %359 = vmatmul.mubr.f32.gmra.mrb[0].mxu0 %v227
    %v360 = vpop.f32.mrb[0].mxu0
    %v361 = vadd.f32 %v272, %v360
    %v362 = vpop.f32.mrb[0].mxu0
    %363 = vmatprep.mubr.f32.mxu0 %v230
    %364 = vmatmul.mubr.f32.gmra.mrb[0].mxu0 %v229
    %v365 = vpop.f32.mrb[0].mxu0
    %v366 = vadd.f32 %v272, %v365
    %v367 = vpop.f32.mrb[0].mxu0
    %368 = vmatprep.mubr.f32.mxu0 %v232
    %369 = vmatmul.mubr.f32.gmra.mrb[0].mxu0 %v231
    %v370 = vpop.f32.mrb[0].mxu0
    %v371 = vadd.f32 %v272, %v370
    %v372 = vpop.f32.mrb[0].mxu0
    %373 = vmatprep.mubr.f32.mxu0 %v234
    %374 = vmatmul.mubr.f32.gmra.mrb[0].mxu0 %v233
    %v375 = vpop.f32.mrb[0].mxu0
    %v376 = vadd.f32 %v272, %v375
    %v377 = vpop.f32.mrb[0].mxu0
    %378 = vdwg.mxu0
    %v379 = vmax.f32 %v341, 0.0
    %v380 = vmax.f32 %v346, 0.0
    %v381 = vmax.f32 %v351, 0.0
    %v382 = vmax.f32 %v356, 0.0
    %v383 = vmax.f32 %v361, 0.0
    %v384 = vmax.f32 %v366, 0.0
    %v385 = vmax.f32 %v371, 0.0
    %v386 = vmax.f32 %v376, 0.0
    %v387 = vld [vmem:[%s5] sm:$0xff]
    %v388 = vld [vmem:[%s5 + $0x8] sm:$0xff]
    %v389 = vld [vmem:[%s5 + $0x10] sm:$0xff]
    %v390 = vld [vmem:[%s5 + $0x18] sm:$0xff]
    %v391 = vld [vmem:[%s5 + $0x20] sm:$0xff]
    %v392 = vld [vmem:[%s5 + $0x28] sm:$0xff]
    %v393 = vld [vmem:[%s5 + $0x30] sm:$0xff]
    %v394 = vld [vmem:[%s5 + $0x38] sm:$0xff]
    %v395 = vld [vmem:[%s5 + $0x40] sm:$0xff]
    %v396 = vld [vmem:[%s5 + $0x48] sm:$0xff]
    %v397 = vld [vmem:[%s5 + $0x50] sm:$0xff]
    %v398 = vld [vmem:[%s5 + $0x58] sm:$0xff]
    %v399 = vld [vmem:[%s5 + $0x60] sm:$0xff]
    %v400 = vld [vmem:[%s5 + $0x68] sm:$0xff]
    %v401 = vld [vmem:[%s5 + $0x70] sm:$0xff]
    %v402 = vld [vmem:[%s5 + $0x78] sm:$0xff]
    %v403 = vld [vmem:[%s6] sm:$0x1]
    %v405 = vlaneseq
    %v406 = vshrl.u32 %v405, 7
    %v407 = vsub.s32 0, %v406
    %v408 = vrot.slane %v403, %v407
    %410 = vmatprep.subr.mxu0 0.0
    %411 = vmatpush1.msra.mxu0 %v387
    %412 = vmatprep.subr.mxu0 0.0
    %413 = vmatpush1.msra.mxu0 %v388
    %414 = vmatprep.subr.mxu0 0.0
    %415 = vmatpush1.msra.mxu0 %v389
    %416 = vmatprep.subr.mxu0 0.0
    %417 = vmatpush1.msra.mxu0 %v390
    %418 = vmatprep.subr.mxu0 0.0
    %419 = vmatpush1.msra.mxu0 %v391
    %420 = vmatprep.subr.mxu0 0.0
    %421 = vmatpush1.msra.mxu0 %v392
    %422 = vmatprep.subr.mxu0 0.0
    %423 = vmatpush1.msra.mxu0 %v393
    %424 = vmatprep.subr.mxu0 0.0
    %425 = vmatpush1.msra.mxu0 %v394
    %426 = vmatprep.subr.mxu0 0.0
    %427 = vmatpush1.msra.mxu0 %v395
    %428 = vmatprep.subr.mxu0 0.0
    %429 = vmatpush1.msra.mxu0 %v396
    %430 = vmatprep.subr.mxu0 0.0
    %431 = vmatpush1.msra.mxu0 %v397
    %432 = vmatprep.subr.mxu0 0.0
    %433 = vmatpush1.msra.mxu0 %v398
    %434 = vmatprep.subr.mxu0 0.0
    %435 = vmatpush1.msra.mxu0 %v399
    %436 = vmatprep.subr.mxu0 0.0
    %437 = vmatpush1.msra.mxu0 %v400
    %438 = vmatprep.subr.mxu0 0.0
    %439 = vmatpush1.msra.mxu0 %v401
    %440 = vmatprep.subr.mxu0 0.0
    %441 = vmatpush1.msra.mxu0 %v402
    %442 = vmatprep.subr.mxu0 0.0
    %443 = vmatpush1.msra.mxu0 0.0
    %444 = vmatprep.subr.mxu0 0.0
    %445 = vmatpush1.msra.mxu0 0.0
    %446 = vmatprep.subr.mxu0 0.0
    %447 = vmatpush1.msra.mxu0 0.0
    %448 = vmatprep.subr.mxu0 0.0
    %449 = vmatpush1.msra.mxu0 0.0
    %450 = vmatprep.subr.mxu0 0.0
    %451 = vmatpush1.msra.mxu0 0.0
    %452 = vmatprep.subr.mxu0 0.0
    %453 = vmatpush1.msra.mxu0 0.0
    %454 = vmatprep.subr.mxu0 0.0
    %455 = vmatpush1.msra.mxu0 0.0
    %456 = vmatprep.subr.mxu0 0.0
    %457 = vmatpush1.msra.mxu0 0.0
    %458 = vmatprep.subr.mxu0 0.0
    %459 = vmatpush1.msra.mxu0 0.0
    %460 = vmatprep.subr.mxu0 0.0
    %461 = vmatpush1.msra.mxu0 0.0
    %462 = vmatprep.subr.mxu0 0.0
    %463 = vmatpush1.msra.mxu0 0.0
    %464 = vmatprep.subr.mxu0 0.0
    %465 = vmatpush1.msra.mxu0 0.0
    %466 = vmatprep.subr.mxu0 0.0
    %467 = vmatpush1.msra.mxu0 0.0
    %468 = vmatprep.subr.mxu0 0.0
    %469 = vmatpush1.msra.mxu0 0.0
    %470 = vmatprep.subr.mxu0 0.0
    %471 = vmatpush1.msra.mxu0 0.0
    %472 = vmatprep.subr.mxu0 0.0
    %473 = vmatpush1.msra.mxu0 0.0
    %474 = vmatprep.mubr.f32.mxu0 0.0
    %475 = vmatmul.mubr.f32.gmra.mrb[0].mxu0 %v379
    %v476 = vpop.f32.mrb[0].mxu0
    %v477 = vadd.f32 %v408, %v476
    %v478 = vpop.f32.mrb[0].mxu0
    %479 = vmatprep.mubr.f32.mxu0 0.0
    %480 = vmatmul.mubr.f32.gmra.mrb[0].mxu0 %v380
    %v481 = vpop.f32.mrb[0].mxu0
    %v482 = vadd.f32 %v408, %v481
    %v483 = vpop.f32.mrb[0].mxu0
    %484 = vmatprep.mubr.f32.mxu0 0.0
    %485 = vmatmul.mubr.f32.gmra.mrb[0].mxu0 %v381
    %v486 = vpop.f32.mrb[0].mxu0
    %v487 = vadd.f32 %v408, %v486
    %v488 = vpop.f32.mrb[0].mxu0
    %489 = vmatprep.mubr.f32.mxu0 0.0
    %490 = vmatmul.mubr.f32.gmra.mrb[0].mxu0 %v382
    %v491 = vpop.f32.mrb[0].mxu0
    %v492 = vadd.f32 %v408, %v491
    %v493 = vpop.f32.mrb[0].mxu0
    %494 = vmatprep.mubr.f32.mxu0 0.0
    %495 = vmatmul.mubr.f32.gmra.mrb[0].mxu0 %v383
    %v496 = vpop.f32.mrb[0].mxu0
    %v497 = vadd.f32 %v408, %v496
    %v498 = vpop.f32.mrb[0].mxu0
    %499 = vmatprep.mubr.f32.mxu0 0.0
    %500 = vmatmul.mubr.f32.gmra.mrb[0].mxu0 %v384
    %v501 = vpop.f32.mrb[0].mxu0
    %v502 = vadd.f32 %v408, %v501
    %v503 = vpop.f32.mrb[0].mxu0
    %504 = vmatprep.mubr.f32.mxu0 0.0
    %505 = vmatmul.mubr.f32.gmra.mrb[0].mxu0 %v385
    %v506 = vpop.f32.mrb[0].mxu0
    %v507 = vadd.f32 %v408, %v506
    %v508 = vpop.f32.mrb[0].mxu0
    %509 = vmatprep.mubr.f32.mxu0 0.0
    %510 = vmatmul.mubr.f32.gmra.mrb[0].mxu0 %v386
    %v511 = vpop.f32.mrb[0].mxu0
    %v512 = vadd.f32 %v408, %v511
    %v513 = vpop.f32.mrb[0].mxu0
    %514 = vdwg.mxu0
    %v515 = vmax.f32 %v477, 0.0
    %v516 = vmax.f32 %v482, 0.0
    %v517 = vmax.f32 %v487, 0.0
    %v518 = vmax.f32 %v492, 0.0
    %v519 = vmax.f32 %v497, 0.0
    %v520 = vmax.f32 %v502, 0.0
    %v521 = vmax.f32 %v507, 0.0
    %v522 = vmax.f32 %v512, 0.0
    %v523 = vld [vmem:[%s7] sm:$0xff]
    %v524 = vld [vmem:[%s7 + $0x8] sm:$0xff]
    %v525 = vld [vmem:[%s7 + $0x10] sm:$0xff]
    %v526 = vld [vmem:[%s7 + $0x18] sm:$0xff]
    %v527 = vld [vmem:[%s7 + $0x20] sm:$0xff]
    %v528 = vld [vmem:[%s7 + $0x28] sm:$0xff]
    %v529 = vld [vmem:[%s7 + $0x30] sm:$0xff]
    %v530 = vld [vmem:[%s7 + $0x38] sm:$0xff]
    %v531 = vld [vmem:[%s8] sm:$0x1]
    %v533 = vlaneseq
    %v534 = vshrl.u32 %v533, 7
    %v535 = vsub.s32 0, %v534
    %v536 = vrot.slane %v531, %v535
    %vm538 = vcmask 523264
    %v540 = vsel %vm538, %v515, 0
    %v543 = vsel %vm538, %v516, 0
    %v546 = vsel %vm538, %v517, 0
    %v549 = vsel %vm538, %v518, 0
    %v552 = vsel %vm538, %v519, 0
    %v555 = vsel %vm538, %v520, 0
    %v558 = vsel %vm538, %v521, 0
    %v561 = vsel %vm538, %v522, 0
    %563 = vmatprep.subr.mxu0 0.0
    %564 = vmatpush1.msra.mxu0 %v523
    %565 = vmatprep.subr.mxu0 0.0
    %566 = vmatpush1.msra.mxu0 %v524
    %567 = vmatprep.subr.mxu0 0.0
    %568 = vmatpush1.msra.mxu0 %v525
    %569 = vmatprep.subr.mxu0 0.0
    %570 = vmatpush1.msra.mxu0 %v526
    %571 = vmatprep.subr.mxu0 0.0
    %572 = vmatpush1.msra.mxu0 %v527
    %573 = vmatprep.subr.mxu0 0.0
    %574 = vmatpush1.msra.mxu0 %v528
    %575 = vmatprep.subr.mxu0 0.0
    %576 = vmatpush1.msra.mxu0 %v529
    %577 = vmatprep.subr.mxu0 0.0
    %578 = vmatpush1.msra.mxu0 %v530
    %579 = vmatprep.subr.mxu0 0.0
    %580 = vmatpush1.msra.mxu0 0.0
    %581 = vmatprep.subr.mxu0 0.0
    %582 = vmatpush1.msra.mxu0 0.0
    %583 = vmatprep.subr.mxu0 0.0
    %584 = vmatpush1.msra.mxu0 0.0
    %585 = vmatprep.subr.mxu0 0.0
    %586 = vmatpush1.msra.mxu0 0.0
    %587 = vmatprep.subr.mxu0 0.0
    %588 = vmatpush1.msra.mxu0 0.0
    %589 = vmatprep.subr.mxu0 0.0
    %590 = vmatpush1.msra.mxu0 0.0
    %591 = vmatprep.subr.mxu0 0.0
    %592 = vmatpush1.msra.mxu0 0.0
    %593 = vmatprep.subr.mxu0 0.0
    %594 = vmatpush1.msra.mxu0 0.0
    %595 = vmatprep.subr.mxu0 0.0
    %596 = vmatpush1.msra.mxu0 0.0
    %597 = vmatprep.subr.mxu0 0.0
    %598 = vmatpush1.msra.mxu0 0.0
    %599 = vmatprep.subr.mxu0 0.0
    %600 = vmatpush1.msra.mxu0 0.0
    %601 = vmatprep.subr.mxu0 0.0
    %602 = vmatpush1.msra.mxu0 0.0
    %603 = vmatprep.subr.mxu0 0.0
    %604 = vmatpush1.msra.mxu0 0.0
    %605 = vmatprep.subr.mxu0 0.0
    %606 = vmatpush1.msra.mxu0 0.0
    %607 = vmatprep.subr.mxu0 0.0
    %608 = vmatpush1.msra.mxu0 0.0
    %609 = vmatprep.subr.mxu0 0.0
    %610 = vmatpush1.msra.mxu0 0.0
    %611 = vmatprep.subr.mxu0 0.0
    %612 = vmatpush1.msra.mxu0 0.0
    %613 = vmatprep.subr.mxu0 0.0
    %614 = vmatpush1.msra.mxu0 0.0
    %615 = vmatprep.subr.mxu0 0.0
    %616 = vmatpush1.msra.mxu0 0.0
    %617 = vmatprep.subr.mxu0 0.0
    %618 = vmatpush1.msra.mxu0 0.0
    %619 = vmatprep.subr.mxu0 0.0
    %620 = vmatpush1.msra.mxu0 0.0
    %621 = vmatprep.subr.mxu0 0.0
    %622 = vmatpush1.msra.mxu0 0.0
    %623 = vmatprep.subr.mxu0 0.0
    %624 = vmatpush1.msra.mxu0 0.0
    %625 = vmatprep.subr.mxu0 0.0
    %626 = vmatpush1.msra.mxu0 0.0
    %627 = vmatprep.mubr.f32.mxu0 0.0
    %628 = vmatmul.mubr.f32.gmra.mrb[0].mxu0 %v540
    %v629 = vpop.f32.mrb[0].mxu0
    %v630 = vadd.f32 %v536, %v629
    %v631 = vpop.f32.mrb[0].mxu0
    %632 = vmatprep.mubr.f32.mxu0 0.0
    %633 = vmatmul.mubr.f32.gmra.mrb[0].mxu0 %v543
    %v634 = vpop.f32.mrb[0].mxu0
    %v635 = vadd.f32 %v536, %v634
    %v636 = vpop.f32.mrb[0].mxu0
    %637 = vmatprep.mubr.f32.mxu0 0.0
    %638 = vmatmul.mubr.f32.gmra.mrb[0].mxu0 %v546
    %v639 = vpop.f32.mrb[0].mxu0
    %v640 = vadd.f32 %v536, %v639
    %v641 = vpop.f32.mrb[0].mxu0
    %642 = vmatprep.mubr.f32.mxu0 0.0
    %643 = vmatmul.mubr.f32.gmra.mrb[0].mxu0 %v549
    %v644 = vpop.f32.mrb[0].mxu0
    %v645 = vadd.f32 %v536, %v644
    %v646 = vpop.f32.mrb[0].mxu0
    %647 = vmatprep.mubr.f32.mxu0 0.0
    %648 = vmatmul.mubr.f32.gmra.mrb[0].mxu0 %v552
    %v649 = vpop.f32.mrb[0].mxu0
    %v650 = vadd.f32 %v536, %v649
    %v651 = vpop.f32.mrb[0].mxu0
    %652 = vmatprep.mubr.f32.mxu0 0.0
    %653 = vmatmul.mubr.f32.gmra.mrb[0].mxu0 %v555
    %v654 = vpop.f32.mrb[0].mxu0
    %v655 = vadd.f32 %v536, %v654
    %v656 = vpop.f32.mrb[0].mxu0
    %657 = vmatprep.mubr.f32.mxu0 0.0
    %658 = vmatmul.mubr.f32.gmra.mrb[0].mxu0 %v558
    %v659 = vpop.f32.mrb[0].mxu0
    %v660 = vadd.f32 %v536, %v659
    %v661 = vpop.f32.mrb[0].mxu0
    %662 = vmatprep.mubr.f32.mxu0 0.0
    %663 = vmatmul.mubr.f32.gmra.mrb[0].mxu0 %v561
    %v664 = vpop.f32.mrb[0].mxu0
    %v665 = vadd.f32 %v536, %v664
    %v666 = vpop.f32.mrb[0].mxu0
    %667 = vdwg.mxu0
    %v668 = vmax.f32 %v630, 0.0
    %v669 = vmax.f32 %v635, 0.0
    %v670 = vmax.f32 %v640, 0.0
    %v671 = vmax.f32 %v645, 0.0
    %v672 = vmax.f32 %v650, 0.0
    %v673 = vmax.f32 %v655, 0.0
    %v674 = vmax.f32 %v660, 0.0
    %v675 = vmax.f32 %v665, 0.0
    %v676 = vld [vmem:[#allocation2] sm:$0xff]
    %v677 = vld [vmem:[#allocation2 + $0x8] sm:$0xff]
    %v678 = vld [vmem:[#allocation2 + $0x10] sm:$0xff]
    %v679 = vld [vmem:[#allocation2 + $0x18] sm:$0xff]
    %v680 = vld [vmem:[%s10] sm:$0x1]
    %v682 = vlaneseq
    %v683 = vshrl.u32 %v682, 7
    %v684 = vsub.s32 0, %v683
    %v685 = vrot.slane %v680, %v684
    %v688 = vsel %vm81, %v668, 0
    %v691 = vsel %vm81, %v669, 0
    %v694 = vsel %vm81, %v670, 0
    %v697 = vsel %vm81, %v671, 0
    %v700 = vsel %vm81, %v672, 0
    %v703 = vsel %vm81, %v673, 0
    %v706 = vsel %vm81, %v674, 0
    %v709 = vsel %vm81, %v675, 0
    %711 = vmatprep.subr.mxu0 0.0
    %712 = vmatpush1.msra.mxu0 %v676
    %713 = vmatprep.subr.mxu0 0.0
    %714 = vmatpush1.msra.mxu0 %v677
    %715 = vmatprep.subr.mxu0 0.0
    %716 = vmatpush1.msra.mxu0 %v678
    %717 = vmatprep.subr.mxu0 0.0
    %718 = vmatpush1.msra.mxu0 %v679
    %719 = vmatprep.subr.mxu0 0.0
    %720 = vmatpush1.msra.mxu0 0.0
    %721 = vmatprep.subr.mxu0 0.0
    %722 = vmatpush1.msra.mxu0 0.0
    %723 = vmatprep.subr.mxu0 0.0
    %724 = vmatpush1.msra.mxu0 0.0
    %725 = vmatprep.subr.mxu0 0.0
    %726 = vmatpush1.msra.mxu0 0.0
    %727 = vmatprep.subr.mxu0 0.0
    %728 = vmatpush1.msra.mxu0 0.0
    %729 = vmatprep.subr.mxu0 0.0
    %730 = vmatpush1.msra.mxu0 0.0
    %731 = vmatprep.subr.mxu0 0.0
    %732 = vmatpush1.msra.mxu0 0.0
    %733 = vmatprep.subr.mxu0 0.0
    %734 = vmatpush1.msra.mxu0 0.0
    %735 = vmatprep.subr.mxu0 0.0
    %736 = vmatpush1.msra.mxu0 0.0
    %737 = vmatprep.subr.mxu0 0.0
    %738 = vmatpush1.msra.mxu0 0.0
    %739 = vmatprep.subr.mxu0 0.0
    %740 = vmatpush1.msra.mxu0 0.0
    %741 = vmatprep.subr.mxu0 0.0
    %742 = vmatpush1.msra.mxu0 0.0
    %743 = vmatprep.subr.mxu0 0.0
    %744 = vmatpush1.msra.mxu0 0.0
    %745 = vmatprep.subr.mxu0 0.0
    %746 = vmatpush1.msra.mxu0 0.0
    %747 = vmatprep.subr.mxu0 0.0
    %748 = vmatpush1.msra.mxu0 0.0
    %749 = vmatprep.subr.mxu0 0.0
    %750 = vmatpush1.msra.mxu0 0.0
    %751 = vmatprep.subr.mxu0 0.0
    %752 = vmatpush1.msra.mxu0 0.0
    %753 = vmatprep.subr.mxu0 0.0
    %754 = vmatpush1.msra.mxu0 0.0
    %755 = vmatprep.subr.mxu0 0.0
    %756 = vmatpush1.msra.mxu0 0.0
    %757 = vmatprep.subr.mxu0 0.0
    %758 = vmatpush1.msra.mxu0 0.0
    %759 = vmatprep.subr.mxu0 0.0
    %760 = vmatpush1.msra.mxu0 0.0
    %761 = vmatprep.subr.mxu0 0.0
    %762 = vmatpush1.msra.mxu0 0.0
    %763 = vmatprep.subr.mxu0 0.0
    %764 = vmatpush1.msra.mxu0 0.0
    %765 = vmatprep.subr.mxu0 0.0
    %766 = vmatpush1.msra.mxu0 0.0
    %767 = vmatprep.subr.mxu0 0.0
    %768 = vmatpush1.msra.mxu0 0.0
    %769 = vmatprep.subr.mxu0 0.0
    %770 = vmatpush1.msra.mxu0 0.0
    %771 = vmatprep.subr.mxu0 0.0
    %772 = vmatpush1.msra.mxu0 0.0
    %773 = vmatprep.subr.mxu0 0.0
    %774 = vmatpush1.msra.mxu0 0.0
    %775 = vmatprep.mubr.f32.mxu0 0.0
    %776 = vmatmul.mubr.f32.gmra.mrb[0].mxu0 %v688
    %v777 = vpop.f32.mrb[0].mxu0
    %v778 = vadd.f32 %v685, %v777
    %v779 = vpop.f32.mrb[0].mxu0
    %780 = vmatprep.mubr.f32.mxu0 0.0
    %781 = vmatmul.mubr.f32.gmra.mrb[0].mxu0 %v691
    %v782 = vpop.f32.mrb[0].mxu0
    %v783 = vadd.f32 %v685, %v782
    %v784 = vpop.f32.mrb[0].mxu0
    %785 = vmatprep.mubr.f32.mxu0 0.0
    %786 = vmatmul.mubr.f32.gmra.mrb[0].mxu0 %v694
    %v787 = vpop.f32.mrb[0].mxu0
    %v788 = vadd.f32 %v685, %v787
    %v789 = vpop.f32.mrb[0].mxu0
    %790 = vmatprep.mubr.f32.mxu0 0.0
    %791 = vmatmul.mubr.f32.gmra.mrb[0].mxu0 %v697
    %v792 = vpop.f32.mrb[0].mxu0
    %v793 = vadd.f32 %v685, %v792
    %v794 = vpop.f32.mrb[0].mxu0
    %795 = vmatprep.mubr.f32.mxu0 0.0
    %796 = vmatmul.mubr.f32.gmra.mrb[0].mxu0 %v700
    %v797 = vpop.f32.mrb[0].mxu0
    %v798 = vadd.f32 %v685, %v797
    %v799 = vpop.f32.mrb[0].mxu0
    %800 = vmatprep.mubr.f32.mxu0 0.0
    %801 = vmatmul.mubr.f32.gmra.mrb[0].mxu0 %v703
    %v802 = vpop.f32.mrb[0].mxu0
    %v803 = vadd.f32 %v685, %v802
    %v804 = vpop.f32.mrb[0].mxu0
    %805 = vmatprep.mubr.f32.mxu0 0.0
    %806 = vmatmul.mubr.f32.gmra.mrb[0].mxu0 %v706
    %v807 = vpop.f32.mrb[0].mxu0
    %v808 = vadd.f32 %v685, %v807
    %v809 = vpop.f32.mrb[0].mxu0
    %810 = vmatprep.mubr.f32.mxu0 0.0
    %811 = vmatmul.mubr.f32.gmra.mrb[0].mxu0 %v709
    %v812 = vpop.f32.mrb[0].mxu0
    %v813 = vadd.f32 %v685, %v812
    %v814 = vpop.f32.mrb[0].mxu0
    %815 = vdwg.mxu0
    %816 = vst [vmem:[#allocation5] sm:$0xff] %v778
    %817 = vst [vmem:[#allocation5 + $0x8] sm:$0xff] %v783
    %818 = vst [vmem:[#allocation5 + $0x10] sm:$0xff] %v788
    %819 = vst [vmem:[#allocation5 + $0x18] sm:$0xff] %v793
    %820 = vst [vmem:[#allocation5 + $0x20] sm:$0xff] %v798
    %821 = vst [vmem:[#allocation5 + $0x28] sm:$0xff] %v803
    %822 = vst [vmem:[#allocation5 + $0x30] sm:$0xff] %v808
    %823 = vst [vmem:[#allocation5 + $0x38] sm:$0xff] %v813
    // Predicated region
    $region50: #{tpu_custom_call.1} parent=1 // pred_check
      _
    $region51: #{tpu_custom_call.1} parent=1 // pred_check_branch
      %825 = sbr.rel (0) target = $region53
    $region52: #{tpu_custom_call.1} parent=1 // pred_region
      %s827 = ssub.s32 1024, 1024
      %828 = vsyncadd [#allocation4], %s827
      %s829 = sshll.u32 [#allocation5], 4
      %s830 = int_to_ptr.vmem [resolvable:$true] %s829
      %835 = dma.vmem_to_hbm [thread:$0]  %s830, 1024, %s11, [#allocation4], 128, 128, 8
    $region53: #{tpu_custom_call.1} parent=1 // pred_fallthru
      _
    // Predicated region
    $region54: #{tpu_custom_call.1} parent=1 // pred_check
      _
    $region55: #{tpu_custom_call.1} parent=1 // pred_check_branch
      %837 = sbr.rel (0) target = $region57
    $region56: #{tpu_custom_call.1} parent=1 // pred_region
      %838 = dma.done [#allocation4], 1024
    $region57: #{tpu_custom_call.1} parent=1 // pred_fallthru
      _
    %839 = vsyncpa [#allocation3], 1
    %840 = vsyncpa [#allocation4], 1

</llo_original>
